<compile_context>
chip_gen: v6e
topology: v6e:2x2x1
jax: 0.10.0
libtpu: 0.0.40
codegen_flags: <defaults>
</compile_context>

<pallas_src>
import functools

import jax
import jax.numpy as jnp
from jax import lax
from jax.experimental import pallas as pl
from jax.experimental.pallas import tpu as pltpu

BN_EPS = 1e-5
# Explicit scoped-VMEM limit (safe on v5e/v6e/v7x); our tiles are far below it.
_VMEM_LIMIT = 32 * 1024 * 1024


# ----------------------------- Pallas kernels -------------------------------

def _matmul_stats_kernel(p_ref, w_ref, out_ref, sum_ref, sq_ref):
    """Pass 1 for one M-tile:  W (R,K) @ P (K,TM)  + per-row sum / sum-of-squares.

    out block moves with the M tile; sum/sq blocks have a constant index_map so
    they stay resident in VMEM across the whole ("arbitrary") M grid axis and
    are written back to HBM once at the end -> BN statistics stay global.
    """
    acc = jnp.dot(w_ref[...], p_ref[...],
                  preferred_element_type=jnp.float32)        # (R, TM) f32 on MXU
    out_ref[...] = acc.astype(out_ref.dtype)

    @pl.when(pl.program_id(0) == 0)
    def _init():
        sum_ref[...] = jnp.zeros_like(sum_ref)
        sq_ref[...] = jnp.zeros_like(sq_ref)

    sum_ref[...] += jnp.sum(acc, axis=1, keepdims=True)       # lane reduce (XLU)
    sq_ref[...] += jnp.sum(acc * acc, axis=1, keepdims=True)


def _bn_prelu_kernel(x_ref, scale_ref, shift_ref, alpha_ref, out_ref):
    """Pass 2 for one M-tile: y = x*scale + shift (folded BN), then shared-alpha PReLU."""
    y = x_ref[...].astype(jnp.float32) * scale_ref[...] + shift_ref[...]
    out_ref[...] = jnp.where(y >= 0.0, y, alpha_ref[...] * y).astype(out_ref.dtype)


# --------------------------- pallas_call wrappers ----------------------------

def _pick_m_tile(M, requested=None, target=1024):
    """Largest multiple-of-128 divisor of M that is <= target (else M itself).

    <=1024 keeps double-buffered tiles well inside v7x's 64 MiB VMEM while
    >=512 already reaches ~85% of HBM roofline; override per generation via
    the m_tile argument (e.g. 2048 on v5e/v6e for large images).
    """
    if requested is not None:
        assert requested % 128 == 0 and M % requested == 0, (M, requested)
        return requested
    best, t = None, 128
    while t <= min(M, target):
        if M % t == 0:
            best = t
        t += 128
    return best if best is not None else M


def _matmul_stats(p, w, tm, out_dtype):
    """p: (K, M), w: (R, K)  ->  conv (R, M) in out_dtype, sums (R,), sumsq (R,)."""
    K, M = p.shape
    R = w.shape[0]
    conv, s, q = pl.pallas_call(
        _matmul_stats_kernel,
        grid=(M // tm,),
        in_specs=[
            pl.BlockSpec((K, tm), lambda i: (0, i)),      # patch tile (lane-dense)
            pl.BlockSpec((R, K), lambda i: (0, 0)),       # weights, VMEM-resident
        ],
        out_specs=[
            pl.BlockSpec((R, tm), lambda i: (0, i)),      # conv tile
            pl.BlockSpec((R, 1), lambda i: (0, 0)),       # sum accumulator
            pl.BlockSpec((R, 1), lambda i: (0, 0)),       # sumsq accumulator
        ],
        out_shape=[
            jax.ShapeDtypeStruct((R, M), out_dtype),
            jax.ShapeDtypeStruct((R, 1), jnp.float32),
            jax.ShapeDtypeStruct((R, 1), jnp.float32),
        ],
        compiler_params=pltpu.CompilerParams(
            # The stat accumulators are grid-resident -> M axis must be sequential.
            # (v7x note: emitting per-tile partial sums instead would allow
            #  "parallel" here and split pass 1 across both TensorCores.)
            dimension_semantics=("arbitrary",),
            vmem_limit_bytes=_VMEM_LIMIT,
        ),
    )(p, w)
    return conv, s[:, 0], q[:, 0]


def _bn_prelu_apply(x, scale, shift, alpha, tm, out_dtype):
    """x: (R, M); scale/shift: (R,); alpha: (1,1)  ->  (R, M) in out_dtype."""
    R, M = x.shape
    return pl.pallas_call(
        _bn_prelu_kernel,
        grid=(M // tm,),
        in_specs=[
            pl.BlockSpec((R, tm), lambda i: (0, i)),
            pl.BlockSpec((R, 1), lambda i: (0, 0)),
            pl.BlockSpec((R, 1), lambda i: (0, 0)),
            pl.BlockSpec((1, 1), lambda i: (0, 0)),
        ],
        out_specs=pl.BlockSpec((R, tm), lambda i: (0, i)),
        out_shape=jax.ShapeDtypeStruct((R, M), out_dtype),
        compiler_params=pltpu.CompilerParams(
            dimension_semantics=("parallel",),            # independent tiles (2 TCs on v7x)
            vmem_limit_bytes=_VMEM_LIMIT,
        ),
    )(x, scale.reshape(R, 1).astype(jnp.float32),
      shift.reshape(R, 1).astype(jnp.float32),
      alpha.reshape(1, 1).astype(jnp.float32))


# ------------------------------- JAX glue ------------------------------------

def _im2col_3x3_cm(xp):
    """xp: (N, C, H+2, W+2) padded -> (C*9, N*H*W); row = ci*9 + kh*3 + kw."""
    N, C, Hp, Wp = xp.shape
    H, W = Hp - 2, Wp - 2
    cols = [xp[:, :, a:a + H, b:b + W] for a in range(3) for b in range(3)]
    p = jnp.stack(cols, axis=2)                  # (N, C, 9, H, W)
    p = jnp.transpose(p, (1, 2, 0, 3, 4))        # (C, 9, N, H, W)
    return p.reshape(C * 9, N * H * W)


def _phase_weight(wt):
    """wt: PyTorch ConvTranspose2d weight (Cmid, Cout, 3, 3) -> (4*Cout, 4*Cmid).

    Rows are phase-major (phase = output-pixel parity (py,px) in order
    ee,eo,oe,oo), columns are tap-major over the 2x2 input taps
    [(0,0),(0,1),(1,0),(1,1)] of the sub-pixel decomposition.
    """
    Cmid, Cout = wt.shape[0], wt.shape[1]
    z = jnp.zeros((Cout, Cmid), wt.dtype)

    def g(a, b):                                  # (Cout, Cmid) slice wt[:, :, a, b]^T
        return jnp.transpose(wt[:, :, a, b], (1, 0))

    phases = [
        [g(1, 1), z,       z,       z      ],    # (even, even)
        [g(1, 2), g(1, 0), z,       z      ],    # (even, odd )
        [g(2, 1), z,       g(0, 1), z      ],    # (odd , even)
        [g(2, 2), g(2, 0), g(0, 2), g(0, 0)],    # (odd , odd )
    ]
    return jnp.concatenate([jnp.concatenate(row, axis=1) for row in phases], axis=0)


def _bn_scale_shift(s, q, count, gamma, beta):
    """Fold training-mode BN (biased var, eps inside rsqrt) into y = x*scale + shift."""
    mean = s / count
    var = q / count - mean * mean
    inv = lax.rsqrt(var + BN_EPS)
    scale = gamma * inv
    shift = beta - mean * scale
    return scale, shift


def decoder_up_block(x, params, *, mxu_dtype=jnp.bfloat16, m_tile=None):
    """x: (N, Cin, H, W) NCHW (PyTorch convention). Returns (N, Cout, 2H, 2W)."""
    N, Cin, H, W = x.shape
    w1 = params["w1"]                         # (Cmid, Cin, 3, 3)  OIHW, bias=False
    wt = params["wt"]                         # (Cmid, Cout, 3, 3) PyTorch deconv layout
    Cmid, Cout = w1.shape[0], wt.shape[1]
    M = N * H * W
    tm = _pick_m_tile(M, m_tile)

    # ---- stage 1: ReflectionPad2d(1) + Conv2d 3x3 (no bias) + BN + PReLU ----
    xp = jnp.pad(x.astype(jnp.float32),
                 ((0, 0), (0, 0), (1, 1), (1, 1)), mode="reflect").astype(mxu_dtype)
    p1 = _im2col_3x3_cm(xp)                                    # (Cin*9, M)
    w1m = w1.reshape(Cmid, Cin * 9).astype(mxu_dtype)
    conv1, s1, q1 = _matmul_stats(p1, w1m, tm, out_dtype=mxu_dtype)
    scale1, shift1 = _bn_scale_shift(s1, q1, M, params["g1"], params["be1"])
    # y1 kept in mxu_dtype: it is re-read 4x as stage-2 patch taps.
    y1 = _bn_prelu_apply(conv1, scale1, shift1, params["alpha"], tm, out_dtype=mxu_dtype)
    y1 = y1.reshape(Cmid, N, H, W)

    # ---- stage 2: ConvTranspose2d via 4-phase (sub-pixel) decomposition + BN + PReLU ----
    # NOTE: the deconv bias b2 is intentionally NOT applied here -- a constant
    # per-channel bias right before training-mode BatchNorm cancels in (x - mean).
    y1p = jnp.pad(y1, ((0, 0), (0, 0), (0, 1), (0, 1)))        # zero halo, high side only
    taps = [y1p[:, :, a:a + H, b:b + W] for (a, b) in ((0, 0), (0, 1), (1, 0), (1, 1))]
    p2 = jnp.concatenate(taps, axis=0).reshape(4 * Cmid, M)    # (4*Cmid, M), tap-major rows
    w2m = _phase_weight(wt).astype(mxu_dtype)                  # (4*Cout, 4*Cmid)
    conv2, s2, q2 = _matmul_stats(p2, w2m, tm, out_dtype=mxu_dtype)
    # BN stats are per *channel*: fold the 4 phase rows of each channel together.
    s2c = s2.reshape(4, Cout).sum(axis=0)
    q2c = q2.reshape(4, Cout).sum(axis=0)
    scale2c, shift2c = _bn_scale_shift(s2c, q2c, 4 * M, params["g2"], params["be2"])
    scale2 = jnp.tile(scale2c, 4)                              # per-row (phase-major) copies
    shift2 = jnp.tile(shift2c, 4)
    y2 = _bn_prelu_apply(conv2, scale2, shift2, params["alpha"], tm, out_dtype=jnp.float32)

    # interleave phases: row ph*Cout+co, col n*H*W+i*W+j  ->  out[n, co, 2i+py, 2j+px]
    y2 = y2.reshape(2, 2, Cout, N, H, W)                       # (py, px, co, n, i, j)
    y2 = jnp.transpose(y2, (3, 2, 4, 0, 5, 1)).reshape(N, Cout, 2 * H, 2 * W)
    return y2


# -------------------------- deterministic params ----------------------------

def init_params(key, input_nc, middle_nc, output_nc):
    k0, k1, k2 = jax.random.split(key, 3)
    return {
        # Conv2d weight, PyTorch OIHW layout; bias=False in the module.
        "w1": 0.1 * jax.random.normal(k0, (middle_nc, input_nc, 3, 3), jnp.float32),
        # BatchNorm2d default affine init (weight=1, bias=0).
        "g1": jnp.ones((middle_nc,), jnp.float32),
        "be1": jnp.zeros((middle_nc,), jnp.float32),
        # ConvTranspose2d weight in PyTorch layout (Cin, Cout, kh, kw), bias=True.
        "wt": 0.1 * jax.random.normal(k1, (middle_nc, output_nc, 3, 3), jnp.float32),
        # b2 is only used by the reference: it cancels under training-mode BN,
        # so the Pallas path never touches it (dead compute removed).
        "b2": 0.1 * jax.random.normal(k2, (output_nc,), jnp.float32),
        "g2": jnp.ones((output_nc,), jnp.float32),
        "be2": jnp.zeros((output_nc,), jnp.float32),
        # single nn.PReLU() instance shared by both activations, default init 0.25
        "alpha": jnp.full((1, 1), 0.25, jnp.float32),
    }


# ------------------------------ pure-JAX ref ---------------------------------

def reference(x, params):
    x = x.astype(jnp.float32)
    alpha = params["alpha"]
    hi = lax.Precision.HIGHEST

    def bn_prelu(y, g, be):
        mean = jnp.mean(y, axis=(0, 2, 3), keepdims=True)
        var = jnp.mean((y - mean) ** 2, axis=(0, 2, 3), keepdims=True)
        y = (y - mean) * lax.rsqrt(var + BN_EPS) * g.reshape(1, -1, 1, 1) + be.reshape(1, -1, 1, 1)
        return jnp.where(y >= 0.0, y, alpha * y)

    xp = jnp.pad(x, ((0, 0), (0, 0), (1, 1), (1, 1)), mode="reflect")
    y1 = lax.conv_general_dilated(xp, params["w1"], (1, 1), "VALID",
                                  dimension_numbers=("NCHW", "OIHW", "NCHW"),
                                  precision=hi)
    y1 = bn_prelu(y1, params["g1"], params["be1"])

    wflip = jnp.transpose(params["wt"][:, :, ::-1, ::-1], (1, 0, 2, 3))  # OIHW, flipped
    y2 = lax.conv_general_dilated(y1, wflip, (1, 1), ((1, 2), (1, 2)),
                                  lhs_dilation=(2, 2),
                                  dimension_numbers=("NCHW", "OIHW", "NCHW"),
                                  precision=hi)
    y2 = y2 + params["b2"].reshape(1, -1, 1, 1)
    y2 = bn_prelu(y2, params["g2"], params["be2"])
    return y2


# ---------------------------------- main -------------------------------------

if __name__ == "__main__":
    key = jax.random.PRNGKey(0)
    kx, kp = jax.random.split(key)

    N, input_nc, middle_nc, output_nc, H, W = 2, 4, 8, 4, 16, 16
    x = jax.random.normal(kx, (N, input_nc, H, W), jnp.float32)
    params = init_params(kp, input_nc, middle_nc, output_nc)

    ref = reference(x, params)

    # m_tile=128 -> a 4-step M grid, exercising the cross-tile BN-stat accumulator.
    # (1) f32-MXU path: tight check of tiling / two-pass BN / 4-phase deconv.
    run_f32 = jax.jit(functools.partial(decoder_up_block,
                                        mxu_dtype=jnp.float32, m_tile=128))
    out = jax.block_until_ready(run_f32(x, params))
    assert out.shape == (N, output_nc, 2 * H, 2 * W), out.shape
    err = float(jnp.max(jnp.abs(out - ref)))
    assert jnp.allclose(out, ref, rtol=1e-3, atol=1e-3), err

    # (2) bf16-MXU-operand path (perf config for v6e/v7x): looser tolerance that
    #     only reflects bf16 operand rounding (accumulation / BN / PReLU stay f32).
    run_bf16 = jax.jit(functools.partial(decoder_up_block,
                                         mxu_dtype=jnp.bfloat16, m_tile=128))
    out_bf = jax.block_until_ready(run_bf16(x, params))
    err_bf = float(jnp.max(jnp.abs(out_bf - ref)))
    assert jnp.allclose(out_bf, ref, rtol=5e-2, atol=3e-2), err_bf

    print("KERNEL_OK")
</pallas_src>

<mosaic_0001>
module attributes {stable_mosaic.version = 11 : i64} {
  func.func @_bn_prelu_kernel(%arg0: i32, %arg1: memref<8x128xf32, #tpu.memory_space<vmem>>, %arg2: memref<8x1xf32, #tpu.memory_space<vmem>>, %arg3: memref<8x1xf32, #tpu.memory_space<vmem>>, %arg4: memref<1x1xf32, #tpu.memory_space<vmem>>, %arg5: memref<8x128xf32, #tpu.memory_space<vmem>>) attributes {dimension_semantics = [#tpu.dimension_semantics<parallel>], iteration_bounds = array<i64: 4>, scalar_prefetch = 0 : i64, scratch_operands = 0 : i64, tpu.core_type = #tpu.core_type<tc>, window_params = [{transform_indices = @transform_0, window_bounds = array<i64: 8, 128>}, {pipeline_mode = #tpu.pipeline_mode<synchronous>, transform_indices = @transform_1, window_bounds = array<i64: 8, 1>}, {pipeline_mode = #tpu.pipeline_mode<synchronous>, transform_indices = @transform_2, window_bounds = array<i64: 8, 1>}, {pipeline_mode = #tpu.pipeline_mode<synchronous>, transform_indices = @transform_3, window_bounds = array<i64: 1, 1>}, {transform_indices = @transform_4, window_bounds = array<i64: 8, 128>}]} {
    %c0 = arith.constant 0 : index
    %c0_0 = arith.constant 0 : index
    %0 = vector.load %arg1[%c0, %c0_0] : memref<8x128xf32, #tpu.memory_space<vmem>>, vector<8x128xf32>
    %c0_1 = arith.constant 0 : index
    %c0_2 = arith.constant 0 : index
    %1 = vector.load %arg2[%c0_1, %c0_2] : memref<8x1xf32, #tpu.memory_space<vmem>>, vector<8x1xf32>
    %2 = vector.broadcast %1 : vector<8x1xf32> to vector<8x128xf32>
    %3 = arith.mulf %0, %2 : vector<8x128xf32>
    %c0_3 = arith.constant 0 : index
    %c0_4 = arith.constant 0 : index
    %4 = vector.load %arg3[%c0_3, %c0_4] : memref<8x1xf32, #tpu.memory_space<vmem>>, vector<8x1xf32>
    %5 = vector.broadcast %4 : vector<8x1xf32> to vector<8x128xf32>
    %6 = arith.addf %3, %5 : vector<8x128xf32>
    %cst = arith.constant 0.000000e+00 : f32
    %7 = vector.broadcast %cst : f32 to vector<8x128xf32>
    %8 = arith.cmpf oge, %6, %7 : vector<8x128xf32>
    %c0_5 = arith.constant 0 : index
    %c0_6 = arith.constant 0 : index
    %9 = vector.load %arg4[%c0_5, %c0_6] : memref<1x1xf32, #tpu.memory_space<vmem>>, vector<1x1xf32>
    %10 = vector.broadcast %9 : vector<1x1xf32> to vector<8x128xf32>
    %11 = arith.mulf %10, %6 : vector<8x128xf32>
    %12 = arith.select %8, %6, %11 : vector<8x128xi1>, vector<8x128xf32>
    %c0_7 = arith.constant 0 : index
    %c0_8 = arith.constant 0 : index
    %13 = vector.load %arg5[%c0_7, %c0_8] : memref<8x128xf32, #tpu.memory_space<vmem>>, vector<8x128xf32>
    tpu.vector_store %arg5[%c0_7, %c0_8], %12 {strides = array<i32>} : memref<8x128xf32, #tpu.memory_space<vmem>>, vector<8x128xf32>,
    return
  }
  func.func @transform_0(%arg0: i32) -> (i32, i32) {
    %c0_i32 = arith.constant 0 : i32
    %c0_i32_0 = arith.constant 0 : i32
    return %c0_i32, %arg0 : i32, i32
  }
  func.func @transform_1(%arg0: i32) -> (i32, i32) {
    %c0_i32 = arith.constant 0 : i32
    %c0_i32_0 = arith.constant 0 : i32
    %c0_i32_1 = arith.constant 0 : i32
    return %c0_i32, %c0_i32_0 : i32, i32
  }
  func.func @transform_2(%arg0: i32) -> (i32, i32) {
    %c0_i32 = arith.constant 0 : i32
    %c0_i32_0 = arith.constant 0 : i32
    %c0_i32_1 = arith.constant 0 : i32
    return %c0_i32, %c0_i32_0 : i32, i32
  }
  func.func @transform_3(%arg0: i32) -> (i32, i32) {
    %c0_i32 = arith.constant 0 : i32
    %c0_i32_0 = arith.constant 0 : i32
    %c0_i32_1 = arith.constant 0 : i32
    return %c0_i32, %c0_i32_0 : i32, i32
  }
  func.func @transform_4(%arg0: i32) -> (i32, i32) {
    %c0_i32 = arith.constant 0 : i32
    %c0_i32_0 = arith.constant 0 : i32
    return %c0_i32, %arg0 : i32, i32
  }
}

module attributes {stable_mosaic.version = 11 : i64} {
  func.func @_matmul_stats_kernel(%arg0: i32, %arg1: memref<36x128xf32, #tpu.memory_space<vmem>>, %arg2: memref<8x36xf32, #tpu.memory_space<vmem>>, %arg3: memref<8x128xf32, #tpu.memory_space<vmem>>, %arg4: memref<8x1xf32, #tpu.memory_space<vmem>>, %arg5: memref<8x1xf32, #tpu.memory_space<vmem>>) attributes {dimension_semantics = [#tpu.dimension_semantics<arbitrary>], iteration_bounds = array<i64: 4>, scalar_prefetch = 0 : i64, scratch_operands = 0 : i64, tpu.core_type = #tpu.core_type<tc>, window_params = [{transform_indices = @transform_0, window_bounds = array<i64: 36, 128>}, {pipeline_mode = #tpu.pipeline_mode<synchronous>, transform_indices = @transform_1, window_bounds = array<i64: 8, 36>}, {transform_indices = @transform_2, window_bounds = array<i64: 8, 128>}, {pipeline_mode = #tpu.pipeline_mode<synchronous>, transform_indices = @transform_3, window_bounds = array<i64: 8, 1>}, {pipeline_mode = #tpu.pipeline_mode<synchronous>, transform_indices = @transform_4, window_bounds = array<i64: 8, 1>}]} {
    %c0 = arith.constant 0 : index
    %c0_0 = arith.constant 0 : index
    %0 = vector.load %arg2[%c0, %c0_0] : memref<8x36xf32, #tpu.memory_space<vmem>>, vector<8x36xf32>
    %c0_1 = arith.constant 0 : index
    %c0_2 = arith.constant 0 : index
    %1 = vector.load %arg1[%c0_1, %c0_2] : memref<36x128xf32, #tpu.memory_space<vmem>>, vector<36x128xf32>
    %cst = arith.constant dense<0.000000e+00> : vector<8x128xf32>
    %2 = tpu.matmul %0, %1, %cst {dimension_numbers = #tpu.dot_dimension_numbers<[1], [0], [0], [1], [0, 0, 1, 1], [], []>} : vector<8x36xf32>, vector<36x128xf32>, vector<8x128xf32> -> vector<8x128xf32>
    %c0_3 = arith.constant 0 : index
    %c0_4 = arith.constant 0 : index
    %3 = vector.load %arg3[%c0_3, %c0_4] : memref<8x128xf32, #tpu.memory_space<vmem>>, vector<8x128xf32>
    tpu.vector_store %arg3[%c0_3, %c0_4], %2 {strides = array<i32>} : memref<8x128xf32, #tpu.memory_space<vmem>>, vector<8x128xf32>,
    %c0_i32 = arith.constant 0 : i32
    %4 = arith.cmpi eq, %arg0, %c0_i32 : i32
    %5 = arith.extui %4 : i1 to i32
    %c0_i32_5 = arith.constant 0 : i32
    %6 = arith.cmpi ne, %5, %c0_i32_5 : i32
    scf.if %6 {
      %cst_16 = arith.constant 0.000000e+00 : f32
      %18 = vector.broadcast %cst_16 : f32 to vector<8x1xf32>
      %c0_17 = arith.constant 0 : index
      %c0_18 = arith.constant 0 : index
      %19 = vector.load %arg4[%c0_17, %c0_18] : memref<8x1xf32, #tpu.memory_space<vmem>>, vector<8x1xf32>
      tpu.vector_store %arg4[%c0_17, %c0_18], %18 {strides = array<i32>} : memref<8x1xf32, #tpu.memory_space<vmem>>, vector<8x1xf32>,
      %cst_19 = arith.constant 0.000000e+00 : f32
      %20 = vector.broadcast %cst_19 : f32 to vector<8x1xf32>
      %c0_20 = arith.constant 0 : index
      %c0_21 = arith.constant 0 : index
      %21 = vector.load %arg5[%c0_20, %c0_21] : memref<8x1xf32, #tpu.memory_space<vmem>>, vector<8x1xf32>
      tpu.vector_store %arg5[%c0_20, %c0_21], %20 {strides = array<i32>} : memref<8x1xf32, #tpu.memory_space<vmem>>, vector<8x1xf32>,
    } else {
    }
    %c0_6 = arith.constant 0 : index
    %c0_7 = arith.constant 0 : index
    %7 = vector.load %arg4[%c0_6, %c0_7] : memref<8x1xf32, #tpu.memory_space<vmem>>, vector<8x1xf32>
    %cst_8 = arith.constant dense<0.000000e+00> : vector<8xf32>
    %8 = vector.multi_reduction <add>, %2, %cst_8 [1] : vector<8x128xf32> to vector<8xf32>
    %9 = vector.shape_cast %8 : vector<8xf32> to vector<8x1xf32>
    %10 = arith.addf %7, %9 : vector<8x1xf32>
    %c0_9 = arith.constant 0 : index
    %c0_10 = arith.constant 0 : index
    %11 = vector.load %arg4[%c0_9, %c0_10] : memref<8x1xf32, #tpu.memory_space<vmem>>, vector<8x1xf32>
    tpu.vector_store %arg4[%c0_9, %c0_10], %10 {strides = array<i32>} : memref<8x1xf32, #tpu.memory_space<vmem>>, vector<8x1xf32>,
    %c0_11 = arith.constant 0 : index
    %c0_12 = arith.constant 0 : index
    %12 = vector.load %arg5[%c0_11, %c0_12] : memref<8x1xf32, #tpu.memory_space<vmem>>, vector<8x1xf32>
    %13 = arith.mulf %2, %2 : vector<8x128xf32>
    %cst_13 = arith.constant dense<0.000000e+00> : vector<8xf32>
    %14 = vector.multi_reduction <add>, %13, %cst_13 [1] : vector<8x128xf32> to vector<8xf32>
    %15 = vector.shape_cast %14 : vector<8xf32> to vector<8x1xf32>
    %16 = arith.addf %12, %15 : vector<8x1xf32>
    %c0_14 = arith.constant 0 : index
    %c0_15 = arith.constant 0 : index
    %17 = vector.load %arg5[%c0_14, %c0_15] : memref<8x1xf32, #tpu.memory_space<vmem>>, vector<8x1xf32>
    tpu.vector_store %arg5[%c0_14, %c0_15], %16 {strides = array<i32>} : memref<8x1xf32, #tpu.memory_space<vmem>>, vector<8x1xf32>,
    return
  }
  func.func @transform_0(%arg0: i32) -> (i32, i32) {
    %c0_i32 = arith.constant 0 : i32
    %c0_i32_0 = arith.constant 0 : i32
    return %c0_i32, %arg0 : i32, i32
  }
  func.func @transform_1(%arg0: i32) -> (i32, i32) {
    %c0_i32 = arith.constant 0 : i32
    %c0_i32_0 = arith.constant 0 : i32
    %c0_i32_1 = arith.constant 0 : i32
    return %c0_i32, %c0_i32_0 : i32, i32
  }
  func.func @transform_2(%arg0: i32) -> (i32, i32) {
    %c0_i32 = arith.constant 0 : i32
    %c0_i32_0 = arith.constant 0 : i32
    return %c0_i32, %arg0 : i32, i32
  }
  func.func @transform_3(%arg0: i32) -> (i32, i32) {
    %c0_i32 = arith.constant 0 : i32
    %c0_i32_0 = arith.constant 0 : i32
    %c0_i32_1 = arith.constant 0 : i32
    return %c0_i32, %c0_i32_0 : i32, i32
  }
  func.func @transform_4(%arg0: i32) -> (i32, i32) {
    %c0_i32 = arith.constant 0 : i32
    %c0_i32_0 = arith.constant 0 : i32
    %c0_i32_1 = arith.constant 0 : i32
    return %c0_i32, %c0_i32_0 : i32, i32
  }
}

module attributes {stable_mosaic.version = 11 : i64} {
  func.func @_matmul_stats_kernel(%arg0: i32, %arg1: memref<32x128xf32, #tpu.memory_space<vmem>>, %arg2: memref<16x32xf32, #tpu.memory_space<vmem>>, %arg3: memref<16x128xf32, #tpu.memory_space<vmem>>, %arg4: memref<16x1xf32, #tpu.memory_space<vmem>>, %arg5: memref<16x1xf32, #tpu.memory_space<vmem>>) attributes {dimension_semantics = [#tpu.dimension_semantics<arbitrary>], iteration_bounds = array<i64: 4>, scalar_prefetch = 0 : i64, scratch_operands = 0 : i64, tpu.core_type = #tpu.core_type<tc>, window_params = [{transform_indices = @transform_0, window_bounds = array<i64: 32, 128>}, {pipeline_mode = #tpu.pipeline_mode<synchronous>, transform_indices = @transform_1, window_bounds = array<i64: 16, 32>}, {transform_indices = @transform_2, window_bounds = array<i64: 16, 128>}, {pipeline_mode = #tpu.pipeline_mode<synchronous>, transform_indices = @transform_3, window_bounds = array<i64: 16, 1>}, {pipeline_mode = #tpu.pipeline_mode<synchronous>, transform_indices = @transform_4, window_bounds = array<i64: 16, 1>}]} {
    %c0 = arith.constant 0 : index
    %c0_0 = arith.constant 0 : index
    %0 = vector.load %arg2[%c0, %c0_0] : memref<16x32xf32, #tpu.memory_space<vmem>>, vector<16x32xf32>
    %c0_1 = arith.constant 0 : index
    %c0_2 = arith.constant 0 : index
    %1 = vector.load %arg1[%c0_1, %c0_2] : memref<32x128xf32, #tpu.memory_space<vmem>>, vector<32x128xf32>
    %cst = arith.constant dense<0.000000e+00> : vector<16x128xf32>
    %2 = tpu.matmul %0, %1, %cst {dimension_numbers = #tpu.dot_dimension_numbers<[1], [0], [0], [1], [0, 0, 1, 1], [], []>} : vector<16x32xf32>, vector<32x128xf32>, vector<16x128xf32> -> vector<16x128xf32>
    %c0_3 = arith.constant 0 : index
    %c0_4 = arith.constant 0 : index
    %3 = vector.load %arg3[%c0_3, %c0_4] : memref<16x128xf32, #tpu.memory_space<vmem>>, vector<16x128xf32>
    tpu.vector_store %arg3[%c0_3, %c0_4], %2 {strides = array<i32>} : memref<16x128xf32, #tpu.memory_space<vmem>>, vector<16x128xf32>,
    %c0_i32 = arith.constant 0 : i32
    %4 = arith.cmpi eq, %arg0, %c0_i32 : i32
    %5 = arith.extui %4 : i1 to i32
    %c0_i32_5 = arith.constant 0 : i32
    %6 = arith.cmpi ne, %5, %c0_i32_5 : i32
    scf.if %6 {
      %cst_16 = arith.constant 0.000000e+00 : f32
      %18 = vector.broadcast %cst_16 : f32 to vector<16x1xf32>
      %c0_17 = arith.constant 0 : index
      %c0_18 = arith.constant 0 : index
      %19 = vector.load %arg4[%c0_17, %c0_18] : memref<16x1xf32, #tpu.memory_space<vmem>>, vector<16x1xf32>
      tpu.vector_store %arg4[%c0_17, %c0_18], %18 {strides = array<i32>} : memref<16x1xf32, #tpu.memory_space<vmem>>, vector<16x1xf32>,
      %cst_19 = arith.constant 0.000000e+00 : f32
      %20 = vector.broadcast %cst_19 : f32 to vector<16x1xf32>
      %c0_20 = arith.constant 0 : index
      %c0_21 = arith.constant 0 : index
      %21 = vector.load %arg5[%c0_20, %c0_21] : memref<16x1xf32, #tpu.memory_space<vmem>>, vector<16x1xf32>
      tpu.vector_store %arg5[%c0_20, %c0_21], %20 {strides = array<i32>} : memref<16x1xf32, #tpu.memory_space<vmem>>, vector<16x1xf32>,
    } else {
    }
    %c0_6 = arith.constant 0 : index
    %c0_7 = arith.constant 0 : index
    %7 = vector.load %arg4[%c0_6, %c0_7] : memref<16x1xf32, #tpu.memory_space<vmem>>, vector<16x1xf32>
    %cst_8 = arith.constant dense<0.000000e+00> : vector<16xf32>
    %8 = vector.multi_reduction <add>, %2, %cst_8 [1] : vector<16x128xf32> to vector<16xf32>
    %9 = vector.shape_cast %8 : vector<16xf32> to vector<16x1xf32>
    %10 = arith.addf %7, %9 : vector<16x1xf32>
    %c0_9 = arith.constant 0 : index
    %c0_10 = arith.constant 0 : index
    %11 = vector.load %arg4[%c0_9, %c0_10] : memref<16x1xf32, #tpu.memory_space<vmem>>, vector<16x1xf32>
    tpu.vector_store %arg4[%c0_9, %c0_10], %10 {strides = array<i32>} : memref<16x1xf32, #tpu.memory_space<vmem>>, vector<16x1xf32>,
    %c0_11 = arith.constant 0 : index
    %c0_12 = arith.constant 0 : index
    %12 = vector.load %arg5[%c0_11, %c0_12] : memref<16x1xf32, #tpu.memory_space<vmem>>, vector<16x1xf32>
    %13 = arith.mulf %2, %2 : vector<16x128xf32>
    %cst_13 = arith.constant dense<0.000000e+00> : vector<16xf32>
    %14 = vector.multi_reduction <add>, %13, %cst_13 [1] : vector<16x128xf32> to vector<16xf32>
    %15 = vector.shape_cast %14 : vector<16xf32> to vector<16x1xf32>
    %16 = arith.addf %12, %15 : vector<16x1xf32>
    %c0_14 = arith.constant 0 : index
    %c0_15 = arith.constant 0 : index
    %17 = vector.load %arg5[%c0_14, %c0_15] : memref<16x1xf32, #tpu.memory_space<vmem>>, vector<16x1xf32>
    tpu.vector_store %arg5[%c0_14, %c0_15], %16 {strides = array<i32>} : memref<16x1xf32, #tpu.memory_space<vmem>>, vector<16x1xf32>,
    return
  }
  func.func @transform_0(%arg0: i32) -> (i32, i32) {
    %c0_i32 = arith.constant 0 : i32
    %c0_i32_0 = arith.constant 0 : i32
    return %c0_i32, %arg0 : i32, i32
  }
  func.func @transform_1(%arg0: i32) -> (i32, i32) {
    %c0_i32 = arith.constant 0 : i32
    %c0_i32_0 = arith.constant 0 : i32
    %c0_i32_1 = arith.constant 0 : i32
    return %c0_i32, %c0_i32_0 : i32, i32
  }
  func.func @transform_2(%arg0: i32) -> (i32, i32) {
    %c0_i32 = arith.constant 0 : i32
    %c0_i32_0 = arith.constant 0 : i32
    return %c0_i32, %arg0 : i32, i32
  }
  func.func @transform_3(%arg0: i32) -> (i32, i32) {
    %c0_i32 = arith.constant 0 : i32
    %c0_i32_0 = arith.constant 0 : i32
    %c0_i32_1 = arith.constant 0 : i32
    return %c0_i32, %c0_i32_0 : i32, i32
  }
  func.func @transform_4(%arg0: i32) -> (i32, i32) {
    %c0_i32 = arith.constant 0 : i32
    %c0_i32_0 = arith.constant 0 : i32
    %c0_i32_1 = arith.constant 0 : i32
    return %c0_i32, %c0_i32_0 : i32, i32
  }
}

module attributes {stable_mosaic.version = 11 : i64} {
  func.func @_bn_prelu_kernel(%arg0: i32, %arg1: memref<16x128xf32, #tpu.memory_space<vmem>>, %arg2: memref<16x1xf32, #tpu.memory_space<vmem>>, %arg3: memref<16x1xf32, #tpu.memory_space<vmem>>, %arg4: memref<1x1xf32, #tpu.memory_space<vmem>>, %arg5: memref<16x128xf32, #tpu.memory_space<vmem>>) attributes {dimension_semantics = [#tpu.dimension_semantics<parallel>], iteration_bounds = array<i64: 4>, scalar_prefetch = 0 : i64, scratch_operands = 0 : i64, tpu.core_type = #tpu.core_type<tc>, window_params = [{transform_indices = @transform_0, window_bounds = array<i64: 16, 128>}, {pipeline_mode = #tpu.pipeline_mode<synchronous>, transform_indices = @transform_1, window_bounds = array<i64: 16, 1>}, {pipeline_mode = #tpu.pipeline_mode<synchronous>, transform_indices = @transform_2, window_bounds = array<i64: 16, 1>}, {pipeline_mode = #tpu.pipeline_mode<synchronous>, transform_indices = @transform_3, window_bounds = array<i64: 1, 1>}, {transform_indices = @transform_4, window_bounds = array<i64: 16, 128>}]} {
    %c0 = arith.constant 0 : index
    %c0_0 = arith.constant 0 : index
    %0 = vector.load %arg1[%c0, %c0_0] : memref<16x128xf32, #tpu.memory_space<vmem>>, vector<16x128xf32>
    %c0_1 = arith.constant 0 : index
    %c0_2 = arith.constant 0 : index
    %1 = vector.load %arg2[%c0_1, %c0_2] : memref<16x1xf32, #tpu.memory_space<vmem>>, vector<16x1xf32>
    %2 = vector.broadcast %1 : vector<16x1xf32> to vector<16x128xf32>
    %3 = arith.mulf %0, %2 : vector<16x128xf32>
    %c0_3 = arith.constant 0 : index
    %c0_4 = arith.constant 0 : index
    %4 = vector.load %arg3[%c0_3, %c0_4] : memref<16x1xf32, #tpu.memory_space<vmem>>, vector<16x1xf32>
    %5 = vector.broadcast %4 : vector<16x1xf32> to vector<16x128xf32>
    %6 = arith.addf %3, %5 : vector<16x128xf32>
    %cst = arith.constant 0.000000e+00 : f32
    %7 = vector.broadcast %cst : f32 to vector<16x128xf32>
    %8 = arith.cmpf oge, %6, %7 : vector<16x128xf32>
    %c0_5 = arith.constant 0 : index
    %c0_6 = arith.constant 0 : index
    %9 = vector.load %arg4[%c0_5, %c0_6] : memref<1x1xf32, #tpu.memory_space<vmem>>, vector<1x1xf32>
    %10 = vector.broadcast %9 : vector<1x1xf32> to vector<16x128xf32>
    %11 = arith.mulf %10, %6 : vector<16x128xf32>
    %12 = arith.select %8, %6, %11 : vector<16x128xi1>, vector<16x128xf32>
    %c0_7 = arith.constant 0 : index
    %c0_8 = arith.constant 0 : index
    %13 = vector.load %arg5[%c0_7, %c0_8] : memref<16x128xf32, #tpu.memory_space<vmem>>, vector<16x128xf32>
    tpu.vector_store %arg5[%c0_7, %c0_8], %12 {strides = array<i32>} : memref<16x128xf32, #tpu.memory_space<vmem>>, vector<16x128xf32>,
    return
  }
  func.func @transform_0(%arg0: i32) -> (i32, i32) {
    %c0_i32 = arith.constant 0 : i32
    %c0_i32_0 = arith.constant 0 : i32
    return %c0_i32, %arg0 : i32, i32
  }
  func.func @transform_1(%arg0: i32) -> (i32, i32) {
    %c0_i32 = arith.constant 0 : i32
    %c0_i32_0 = arith.constant 0 : i32
    %c0_i32_1 = arith.constant 0 : i32
    return %c0_i32, %c0_i32_0 : i32, i32
  }
  func.func @transform_2(%arg0: i32) -> (i32, i32) {
    %c0_i32 = arith.constant 0 : i32
    %c0_i32_0 = arith.constant 0 : i32
    %c0_i32_1 = arith.constant 0 : i32
    return %c0_i32, %c0_i32_0 : i32, i32
  }
  func.func @transform_3(%arg0: i32) -> (i32, i32) {
    %c0_i32 = arith.constant 0 : i32
    %c0_i32_0 = arith.constant 0 : i32
    %c0_i32_1 = arith.constant 0 : i32
    return %c0_i32, %c0_i32_0 : i32, i32
  }
  func.func @transform_4(%arg0: i32) -> (i32, i32) {
    %c0_i32 = arith.constant 0 : i32
    %c0_i32_0 = arith.constant 0 : i32
    return %c0_i32, %arg0 : i32, i32
  }
}

</mosaic_0001>

<llo_original>
// kernel: decoder_up_block.5
$region0: #{decoder_up_block.5}
  #allocation0 [shape = 'u32[]', space=smem, size = 0x4, offset = 0x4, fixed_abs, tag = 'smem constant byte address 0x4 - core index']
  #allocation1 [shape = 'u32[144,128]{1,0:T(1,128)}', space=vmem, size = 0x12000, scoped, tag = 'internal scratch']
  #allocation2 [shape = 'f32[1,1]{1,0:T(1,128)S(1)}', space=vmem, size = 0x200, scoped, tag = 'scoped memory for decoder_up_block.5']
  %s0 = inlined_call_operand.vmem [shape: f32[8,512], index: 0, kind: input, shape index: {}]
  %s1 = inlined_call_operand.vmem [shape: f32[8,1], index: 1, kind: input, shape index: {}]
  %s2 = inlined_call_operand.vmem [shape: f32[8,1], index: 2, kind: input, shape index: {}]
  %s3 = inlined_call_operand.<no memory space> [shape: f32[1,1], index: 3, kind: input, shape index: {}]
  %s4 = inlined_call_operand.vmem [shape: f32[8,512], index: 4, kind: output, shape index: {}]
  %s5 = sld [smem:[#allocation0]]
  $region49: #{decoder_up_block.5} parent=0
    _
  %s7 = ssub.s32 1, %s5
  %s8 = scalar_select 0, %s7, %s5
  %v9 = vstv %s3
  %10 = vst [vmem:[#allocation2] sm:$0x1] %v9
  loop: start=0, step=1, limit=6
  $region2: #{decoder_up_block.5} parent=0 // loop_pre_header
    _
  $region3: #{decoder_up_block.5} parent=0 // loop_header
    %s12 = sphi 0, %s16
    %p13 = scmp.ge.s32.totalorder %s12, 6
    %s22 = sphi 0, %s24
    %s25 = sphi 0, %s22
    %s26 = sphi 0, %s25
    %s42 = sphi 0, %s26
    %s46 = sphi 0, %s46
    %s48 = sphi 0, %s46
    %s49 = sphi 0, %s48
    %s63 = sphi 0, %s49
    %s67 = sphi 0, %s67
    %s69 = sphi 0, %s67
    %s70 = sphi 0, %s69
    %s84 = sphi 0, %s70
    %s88 = sphi 0, %s88
    %s90 = sphi 0, %s88
    %s91 = sphi 0, %s90
    %s105 = sphi 0, %s91
    %s111 = sphi 0, %s113
    %s114 = sphi 0, %s111
    %s115 = sphi 0, %s114
    %s131 = sphi 0, %s115
  $region4: #{decoder_up_block.5} parent=0 // loop_header_branch
    %15 = sbr.rel (%p13) target = $region8
  $region5: #{decoder_up_block.5} parent=0 // loop_body
    %s17 = ssub.s32 %s12, 1
    %s18 = ssub.s32 %s12, 2
    %s19 = sadd.s32 %s12, 1
    %s20 = ssub.s32 %s12, %s19
    %p21 = scmp.eq.s32.totalorder %s20, 0
    %s23 = sadd.s32 %s22, 1
    %s24 = scalar_select %p21, %s22, %s23
    %p27 = pneg %p21
    %p28 = scmp.eq.s32.totalorder %s12, 3
    %p29 = por %p27, %p28
    %p30 = scmp.ne.s32.totalorder %s22, %s25
    %p31 = scmp.eq.s32.totalorder %s12, 0
    %p32 = por %p30, %p31
    %p33 = scmp.ne.s32.totalorder %s22, %s25
    %p34 = scmp.eq.s32.totalorder %s17, 3
    %p35 = por %p33, %p34
    %p36 = scmp.ne.s32.totalorder %s25, %s26
    %p37 = scmp.eq.s32.totalorder %s17, 0
    %p38 = por %p36, %p37
    %p39 = scmp.ne.s32.totalorder %s25, %s26
    %p40 = scmp.eq.s32.totalorder %s18, 3
    %p41 = por %p39, %p40
    %p43 = scmp.ne.s32.totalorder %s26, %s42
    %p44 = scmp.eq.s32.totalorder %s18, 0
    %p45 = por %p43, %p44
    %s47 = sadd.s32 %s46, 1
    %p50 = scmp.eq.s32.totalorder %s12, 3
    %p51 = scmp.ne.s32.totalorder %s46, %s48
    %p52 = scmp.eq.s32.totalorder %s12, 0
    %p53 = por %p51, %p52
    %p54 = scmp.ne.s32.totalorder %s46, %s48
    %p55 = scmp.eq.s32.totalorder %s17, 3
    %p56 = por %p54, %p55
    %p57 = scmp.ne.s32.totalorder %s48, %s49
    %p58 = scmp.eq.s32.totalorder %s17, 0
    %p59 = por %p57, %p58
    %p60 = scmp.ne.s32.totalorder %s48, %s49
    %p61 = scmp.eq.s32.totalorder %s18, 3
    %p62 = por %p60, %p61
    %p64 = scmp.ne.s32.totalorder %s49, %s63
    %p65 = scmp.eq.s32.totalorder %s18, 0
    %p66 = por %p64, %p65
    %s68 = sadd.s32 %s67, 1
    %p71 = scmp.eq.s32.totalorder %s12, 3
    %p72 = scmp.ne.s32.totalorder %s67, %s69
    %p73 = scmp.eq.s32.totalorder %s12, 0
    %p74 = por %p72, %p73
    %p75 = scmp.ne.s32.totalorder %s67, %s69
    %p76 = scmp.eq.s32.totalorder %s17, 3
    %p77 = por %p75, %p76
    %p78 = scmp.ne.s32.totalorder %s69, %s70
    %p79 = scmp.eq.s32.totalorder %s17, 0
    %p80 = por %p78, %p79
    %p81 = scmp.ne.s32.totalorder %s69, %s70
    %p82 = scmp.eq.s32.totalorder %s18, 3
    %p83 = por %p81, %p82
    %p85 = scmp.ne.s32.totalorder %s70, %s84
    %p86 = scmp.eq.s32.totalorder %s18, 0
    %p87 = por %p85, %p86
    %s89 = sadd.s32 %s88, 1
    %p92 = scmp.eq.s32.totalorder %s12, 3
    %p93 = scmp.ne.s32.totalorder %s88, %s90
    %p94 = scmp.eq.s32.totalorder %s12, 0
    %p95 = por %p93, %p94
    %p96 = scmp.ne.s32.totalorder %s88, %s90
    %p97 = scmp.eq.s32.totalorder %s17, 3
    %p98 = por %p96, %p97
    %p99 = scmp.ne.s32.totalorder %s90, %s91
    %p100 = scmp.eq.s32.totalorder %s17, 0
    %p101 = por %p99, %p100
    %p102 = scmp.ne.s32.totalorder %s90, %s91
    %p103 = scmp.eq.s32.totalorder %s18, 3
    %p104 = por %p102, %p103
    %p106 = scmp.ne.s32.totalorder %s91, %s105
    %p107 = scmp.eq.s32.totalorder %s18, 0
    %p108 = por %p106, %p107
    %s109 = ssub.s32 %s12, %s19
    %p110 = scmp.eq.s32.totalorder %s109, 0
    %s112 = sadd.s32 %s111, 1
    %s113 = scalar_select %p110, %s111, %s112
    %p116 = pneg %p110
    %p117 = scmp.eq.s32.totalorder %s12, 3
    %p118 = por %p116, %p117
    %p119 = scmp.ne.s32.totalorder %s111, %s114
    %p120 = scmp.eq.s32.totalorder %s12, 0
    %p121 = por %p119, %p120
    %p122 = scmp.ne.s32.totalorder %s111, %s114
    %p123 = scmp.eq.s32.totalorder %s17, 3
    %p124 = por %p122, %p123
    %p125 = scmp.ne.s32.totalorder %s114, %s115
    %p126 = scmp.eq.s32.totalorder %s17, 0
    %p127 = por %p125, %p126
    %p128 = scmp.ne.s32.totalorder %s114, %s115
    %p129 = scmp.eq.s32.totalorder %s18, 3
    %p130 = por %p128, %p129
    %p132 = scmp.ne.s32.totalorder %s115, %s131
    %p133 = scmp.eq.s32.totalorder %s18, 0
    %p134 = por %p132, %p133
    %p135 = scmp.le.s32.totalorder 1, %s12
    %p136 = scmp.lt.s32.totalorder %s12, 5
    %p137 = pnand %p135, %p136
    %p138 = pneg %p137
    // Predicated region
    $region9: #{decoder_up_block.5} parent=5 // pred_check
      _
    $region10: #{decoder_up_block.5} parent=5 // pred_check_branch
      %140 = sbr.rel (%p137) target = $region12
    $region11: #{decoder_up_block.5} parent=5 // pred_region
      %s141 = ssub.s32 %s12, 1
      // Predicated region
      $region13: #{decoder_up_block.5} parent=11 // pred_check
        %p142 = pneg %p59
      $region14: #{decoder_up_block.5} parent=11 // pred_check_branch
        %144 = sbr.rel (%p142) target = $region16
      $region15: #{decoder_up_block.5} parent=11 // pred_region
        _
      $region16: #{decoder_up_block.5} parent=11 // pred_fallthru
        _
      // Predicated region
      $region17: #{decoder_up_block.5} parent=11 // pred_check
        %p145 = pneg %p80
      $region18: #{decoder_up_block.5} parent=11 // pred_check_branch
        %147 = sbr.rel (%p145) target = $region20
      $region19: #{decoder_up_block.5} parent=11 // pred_region
        _
      $region20: #{decoder_up_block.5} parent=11 // pred_fallthru
        _
      // Predicated region
      $region21: #{decoder_up_block.5} parent=11 // pred_check
        %p148 = pneg %p101
      $region22: #{decoder_up_block.5} parent=11 // pred_check_branch
        %150 = sbr.rel (%p148) target = $region24
      $region23: #{decoder_up_block.5} parent=11 // pred_region
        _
      $region24: #{decoder_up_block.5} parent=11 // pred_fallthru
        _
    $region12: #{decoder_up_block.5} parent=5 // pred_fallthru
      _
    %p151 = scmp.lt.s32.totalorder %s12, 4
    // Predicated region
    $region25: #{decoder_up_block.5} parent=5 // pred_check
      %p152 = pneg %p151
    $region26: #{decoder_up_block.5} parent=5 // pred_check_branch
      %154 = sbr.rel (%p152) target = $region28
    $region27: #{decoder_up_block.5} parent=5 // pred_region
      // Predicated region
      $region29: #{decoder_up_block.5} parent=27 // pred_check
        %p155 = pneg %p32
      $region30: #{decoder_up_block.5} parent=27 // pred_check_branch
        %157 = sbr.rel (%p155) target = $region32
      $region31: #{decoder_up_block.5} parent=27 // pred_region
        %p158 = scmp.lt.s32.totalorder %s12, 3
        %s159 = scalar_select %p158, %s12, 3
        %s160 = smul.addr %s159, 8
        %s161 = scalar_lea.vmem %s0, %s160
      $region32: #{decoder_up_block.5} parent=27 // pred_fallthru
        _
    $region28: #{decoder_up_block.5} parent=5 // pred_fallthru
      _
    %p162 = scmp.le.s32.totalorder 1, %s12
    %p163 = scmp.lt.s32.totalorder %s12, 5
    %p164 = pnand %p162, %p163
    %p165 = pneg %p164
    // Predicated region
    $region33: #{decoder_up_block.5} parent=5 // pred_check
      _
    $region34: #{decoder_up_block.5} parent=5 // pred_check_branch
      %167 = sbr.rel (%p164) target = $region36
    $region35: #{decoder_up_block.5} parent=5 // pred_region
      %s168 = ssub.s32 %s12, 1
      %p169 = scmp.lt.s32.totalorder %s17, 3
      %s170 = scalar_select %p169, %s17, 3
      %s171 = smul.addr %s170, 8
      %s172 = scalar_lea.vmem %s0, %s171
      %p173 = pneg %p38
      %p174 = pneg %p35
      %p175 = pneg %p59
      %p176 = pneg %p56
      %p177 = pneg %p80
      %p178 = pneg %p77
      %p179 = pneg %p101
      %p180 = pneg %p98
      %p181 = pneg %p127
      %p182 = pneg %p124
      %p183 = scmp.lt.s32.totalorder %s17, 3
      %s184 = scalar_select %p183, %s17, 3
      %s185 = smul.addr %s184, 8
      %s186 = scalar_lea.vmem %s4, %s185
      %p187 = scmp.lt.s32.totalorder %s17, 3
      %s188 = scalar_select %p187, %s17, 3
      %s189 = smul.addr %s188, 8
      %s190 = scalar_lea.vmem %s0, %s189
      %p191 = scmp.lt.s32.totalorder %s17, 3
      %s192 = scalar_select %p191, %s17, 3
      %s193 = smul.addr %s192, 8
      %s194 = scalar_lea.vmem %s4, %s193
      %v195 = vld [vmem:[%s190] sm:$0xff]
      %v196 = vld [vmem:[%s1] sm:$0xff]
      %198 = vset.pattern.permute.xlu0 0
      %199 = vperm.xlu0 %198, %v196
      %v200 = vpop.permute.xlu0 %199
      %v202 = vmul.f32 %v195, %v200
      %v203 = vld [vmem:[%s2] sm:$0xff]
      %205 = vset.pattern.permute.xlu0 0
      %206 = vperm.xlu0 %205, %v203
      %v207 = vpop.permute.xlu0 %206
      %v209 = vadd.f32 %v202, %v207
      %vm210 = vcmp.ge.f32.partialorder %v209, 0.0
      %v211 = vld [vmem:[#allocation2] sm:$0x1]
      %v213 = vlaneseq
      %v214 = vshrl.u32 %v213, 7
      %v215 = vsub.s32 0, %v214
      %v216 = vrot.slane %v211, %v215
      %217 = vset.pattern.permute.xlu0 0
      %218 = vperm.xlu0 %217, %v216
      %v219 = vpop.permute.xlu0 %218
      %v221 = vmul.f32 %v219, %v209
      %v222 = vsel %vm210, %v209, %v221
      %223 = vst [vmem:[%s194] sm:$0xff] %v222
      %p224 = scmp.lt.s32.totalorder %s17, 3
      %s225 = scalar_select %p224, %s17, 3
      %s226 = smul.addr %s225, 8
      %s227 = scalar_lea.vmem %s4, %s226
      // Predicated region
      $region37: #{decoder_up_block.5} parent=35 // pred_check
        %p228 = pneg %p124
      $region38: #{decoder_up_block.5} parent=35 // pred_check_branch
        %230 = sbr.rel (%p228) target = $region40
      $region39: #{decoder_up_block.5} parent=35 // pred_region
        _
      $region40: #{decoder_up_block.5} parent=35 // pred_fallthru
        _
    $region36: #{decoder_up_block.5} parent=5 // pred_fallthru
      _
    %p231 = scmp.le.s32.totalorder 2, %s12
    // Predicated region
    $region41: #{decoder_up_block.5} parent=5 // pred_check
      %p232 = pneg %p231
    $region42: #{decoder_up_block.5} parent=5 // pred_check_branch
      %234 = sbr.rel (%p232) target = $region44
    $region43: #{decoder_up_block.5} parent=5 // pred_region
      %s235 = ssub.s32 %s12, 2
      // Predicated region
      $region45: #{decoder_up_block.5} parent=43 // pred_check
        %p236 = pneg %p130
      $region46: #{decoder_up_block.5} parent=43 // pred_check_branch
        %238 = sbr.rel (%p236) target = $region48
      $region47: #{decoder_up_block.5} parent=43 // pred_region
        %p239 = scmp.lt.s32.totalorder %s18, 3
        %s240 = scalar_select %p239, %s18, 3
        %s241 = smul.addr %s240, 8
        %s242 = scalar_lea.vmem %s4, %s241
      $region48: #{decoder_up_block.5} parent=43 // pred_fallthru
        _
    $region44: #{decoder_up_block.5} parent=5 // pred_fallthru
      _
  $region6: #{decoder_up_block.5} parent=0 // loop_footer
    %s16 = sadd.s32 1, %s12
  $region7: #{decoder_up_block.5} parent=0 // loop_footer_branch
    %11 = sbr.rel target = $region3
  $region8: #{decoder_up_block.5} parent=0 // loop_exit
    _

// kernel: decoder_up_block.4
$region0: #{decoder_up_block.4}
  #allocation0 [shape = 'u32[]', space=smem, size = 0x4, offset = 0x4, fixed_abs, tag = 'smem constant byte address 0x4 - core index']
  #allocation1 [shape = 'u32[144,128]{1,0:T(1,128)}', space=vmem, size = 0x12000, scoped, tag = 'internal scratch']
  %s0 = inlined_call_operand.vmem [shape: f32[36,512], index: 0, kind: input, shape index: {}]
  %s1 = inlined_call_operand.vmem [shape: f32[8,36], index: 1, kind: input, shape index: {}]
  %s2 = inlined_call_operand.vmem [shape: f32[8,512], index: 2, kind: output, shape index: {0}]
  %s3 = inlined_call_operand.vmem [shape: f32[8,1], index: 3, kind: output, shape index: {1}]
  %s4 = inlined_call_operand.vmem [shape: f32[8,1], index: 4, kind: output, shape index: {2}]
  %5 = xla_tuple %s2, %s3, %s4
  %s6 = sld [smem:[#allocation0]]
  $region99: #{decoder_up_block.4} parent=0
    _
  %s8 = ssub.s32 1, %s6
  %s9 = scalar_select 0, %s8, %s6
  $region1: #{decoder_up_block.4} parent=0
    #allocation2 [shape = 'u8[40960]{0}', space=vmem, size = 0xa000, scoped, tag = 'input window, operand 0']
    loop: start=0, step=1, limit=6
    $region2: #{decoder_up_block.4} parent=1 // loop_pre_header
      _
    $region3: #{decoder_up_block.4} parent=1 // loop_header
      %s11 = sphi 0, %s15
      %p12 = scmp.ge.s32.totalorder %s11, 6
      %s21 = sphi 0, %s23
      %s24 = sphi 0, %s21
      %s25 = sphi 0, %s24
      %s41 = sphi 0, %s25
      %s45 = sphi 0, %s45
      %s47 = sphi 0, %s45
      %s48 = sphi 0, %s47
      %s62 = sphi 0, %s48
      %s68 = sphi 0, %s70
      %s71 = sphi 0, %s68
      %s72 = sphi 0, %s71
      %s88 = sphi 0, %s72
      %s92 = sphi 0, %s92
      %s94 = sphi 0, %s92
      %s95 = sphi 0, %s94
      %s109 = sphi 0, %s95
      %s113 = sphi 0, %s113
      %s115 = sphi 0, %s113
      %s116 = sphi 0, %s115
      %s130 = sphi 0, %s116
    $region4: #{decoder_up_block.4} parent=1 // loop_header_branch
      %14 = sbr.rel (%p12) target = $region8
    $region5: #{decoder_up_block.4} parent=1 // loop_body
      %s16 = ssub.s32 %s11, 1
      %s17 = ssub.s32 %s11, 2
      %s18 = sadd.s32 %s11, 1
      %s19 = ssub.s32 %s11, %s18
      %p20 = scmp.eq.s32.totalorder %s19, 0
      %s22 = sadd.s32 %s21, 1
      %s23 = scalar_select %p20, %s21, %s22
      %p26 = pneg %p20
      %p27 = scmp.eq.s32.totalorder %s11, 3
      %p28 = por %p26, %p27
      %p29 = scmp.ne.s32.totalorder %s21, %s24
      %p30 = scmp.eq.s32.totalorder %s11, 0
      %p31 = por %p29, %p30
      %p32 = scmp.ne.s32.totalorder %s21, %s24
      %p33 = scmp.eq.s32.totalorder %s16, 3
      %p34 = por %p32, %p33
      %p35 = scmp.ne.s32.totalorder %s24, %s25
      %p36 = scmp.eq.s32.totalorder %s16, 0
      %p37 = por %p35, %p36
      %p38 = scmp.ne.s32.totalorder %s24, %s25
      %p39 = scmp.eq.s32.totalorder %s17, 3
      %p40 = por %p38, %p39
      %p42 = scmp.ne.s32.totalorder %s25, %s41
      %p43 = scmp.eq.s32.totalorder %s17, 0
      %p44 = por %p42, %p43
      %s46 = sadd.s32 %s45, 1
      %p49 = scmp.eq.s32.totalorder %s11, 3
      %p50 = scmp.ne.s32.totalorder %s45, %s47
      %p51 = scmp.eq.s32.totalorder %s11, 0
      %p52 = por %p50, %p51
      %p53 = scmp.ne.s32.totalorder %s45, %s47
      %p54 = scmp.eq.s32.totalorder %s16, 3
      %p55 = por %p53, %p54
      %p56 = scmp.ne.s32.totalorder %s47, %s48
      %p57 = scmp.eq.s32.totalorder %s16, 0
      %p58 = por %p56, %p57
      %p59 = scmp.ne.s32.totalorder %s47, %s48
      %p60 = scmp.eq.s32.totalorder %s17, 3
      %p61 = por %p59, %p60
      %p63 = scmp.ne.s32.totalorder %s48, %s62
      %p64 = scmp.eq.s32.totalorder %s17, 0
      %p65 = por %p63, %p64
      %s66 = ssub.s32 %s11, %s18
      %p67 = scmp.eq.s32.totalorder %s66, 0
      %s69 = sadd.s32 %s68, 1
      %s70 = scalar_select %p67, %s68, %s69
      %p73 = pneg %p67
      %p74 = scmp.eq.s32.totalorder %s11, 3
      %p75 = por %p73, %p74
      %p76 = scmp.ne.s32.totalorder %s68, %s71
      %p77 = scmp.eq.s32.totalorder %s11, 0
      %p78 = por %p76, %p77
      %p79 = scmp.ne.s32.totalorder %s68, %s71
      %p80 = scmp.eq.s32.totalorder %s16, 3
      %p81 = por %p79, %p80
      %p82 = scmp.ne.s32.totalorder %s71, %s72
      %p83 = scmp.eq.s32.totalorder %s16, 0
      %p84 = por %p82, %p83
      %p85 = scmp.ne.s32.totalorder %s71, %s72
      %p86 = scmp.eq.s32.totalorder %s17, 3
      %p87 = por %p85, %p86
      %p89 = scmp.ne.s32.totalorder %s72, %s88
      %p90 = scmp.eq.s32.totalorder %s17, 0
      %p91 = por %p89, %p90
      %s93 = sadd.s32 %s92, 1
      %p96 = scmp.eq.s32.totalorder %s11, 3
      %p97 = scmp.ne.s32.totalorder %s92, %s94
      %p98 = scmp.eq.s32.totalorder %s11, 0
      %p99 = por %p97, %p98
      %p100 = scmp.ne.s32.totalorder %s92, %s94
      %p101 = scmp.eq.s32.totalorder %s16, 3
      %p102 = por %p100, %p101
      %p103 = scmp.ne.s32.totalorder %s94, %s95
      %p104 = scmp.eq.s32.totalorder %s16, 0
      %p105 = por %p103, %p104
      %p106 = scmp.ne.s32.totalorder %s94, %s95
      %p107 = scmp.eq.s32.totalorder %s17, 3
      %p108 = por %p106, %p107
      %p110 = scmp.ne.s32.totalorder %s95, %s109
      %p111 = scmp.eq.s32.totalorder %s17, 0
      %p112 = por %p110, %p111
      %s114 = sadd.s32 %s113, 1
      %p117 = scmp.eq.s32.totalorder %s11, 3
      %p118 = scmp.ne.s32.totalorder %s113, %s115
      %p119 = scmp.eq.s32.totalorder %s11, 0
      %p120 = por %p118, %p119
      %p121 = scmp.ne.s32.totalorder %s113, %s115
      %p122 = scmp.eq.s32.totalorder %s16, 3
      %p123 = por %p121, %p122
      %p124 = scmp.ne.s32.totalorder %s115, %s116
      %p125 = scmp.eq.s32.totalorder %s16, 0
      %p126 = por %p124, %p125
      %p127 = scmp.ne.s32.totalorder %s115, %s116
      %p128 = scmp.eq.s32.totalorder %s17, 3
      %p129 = por %p127, %p128
      %p131 = scmp.ne.s32.totalorder %s116, %s130
      %p132 = scmp.eq.s32.totalorder %s17, 0
      %p133 = por %p131, %p132
      %p134 = scmp.le.s32.totalorder 1, %s11
      %p135 = scmp.lt.s32.totalorder %s11, 5
      %p136 = pnand %p134, %p135
      %p137 = pneg %p136
      // Predicated region
      $region9: #{decoder_up_block.4} parent=5 // pred_check
        _
      $region10: #{decoder_up_block.4} parent=5 // pred_check_branch
        %139 = sbr.rel (%p136) target = $region12
      $region11: #{decoder_up_block.4} parent=5 // pred_region
        %s140 = ssub.s32 %s11, 1
        // Predicated region
        $region13: #{decoder_up_block.4} parent=11 // pred_check
          %p141 = pneg %p58
        $region14: #{decoder_up_block.4} parent=11 // pred_check_branch
          %143 = sbr.rel (%p141) target = $region16
        $region15: #{decoder_up_block.4} parent=11 // pred_region
          _
        $region16: #{decoder_up_block.4} parent=11 // pred_fallthru
          _
      $region12: #{decoder_up_block.4} parent=5 // pred_fallthru
        _
      %p144 = scmp.lt.s32.totalorder %s11, 4
      // Predicated region
      $region17: #{decoder_up_block.4} parent=5 // pred_check
        %p145 = pneg %p144
      $region18: #{decoder_up_block.4} parent=5 // pred_check_branch
        %147 = sbr.rel (%p145) target = $region20
      $region19: #{decoder_up_block.4} parent=5 // pred_region
        // Predicated region
        $region21: #{decoder_up_block.4} parent=19 // pred_check
          %p148 = pneg %p31
        $region22: #{decoder_up_block.4} parent=19 // pred_check_branch
          %150 = sbr.rel (%p148) target = $region24
        $region23: #{decoder_up_block.4} parent=19 // pred_region
          %s151 = sand.u32 %s21, 1
          %s152 = sand.u32 %s21, 1
          %s153 = smul.addr %s152, 40
          %s154 = scalar_lea.vmem [#allocation2], %s153
          %s155 = smul.addr %s11, 8
          %s156 = scalar_lea.vmem %s0, %s155
          // Predicated region
          $region25: #{decoder_up_block.4} parent=23 // pred_check
            _
          $region26: #{decoder_up_block.4} parent=23 // pred_check_branch
            %158 = sbr.rel (0) target = $region28
          $region27: #{decoder_up_block.4} parent=23 // pred_region
            // Predicated region
            $region29: #{decoder_up_block.4} parent=27 // pred_check
              _
            $region30: #{decoder_up_block.4} parent=27 // pred_check_branch
              %160 = sbr.rel (0) target = $region32
            $region31: #{decoder_up_block.4} parent=27 // pred_region
              // Predicated region
              $region44: #{decoder_up_block.4} parent=31 // pred_check
                _
              $region45: #{decoder_up_block.4} parent=31 // pred_check_branch
                %184 = sbr.rel (0) target = $region47
              $region46: #{decoder_up_block.4} parent=31 // pred_region
                loop: start=0, step=1, limit=1
                $region48: #{decoder_up_block.4} parent=46 // loop_pre_header
                  _
                $region49: #{decoder_up_block.4} parent=46 // loop_header
                  %s186 = sphi 0, %s190
                  %p187 = scmp.ge.s32.totalorder %s186, 1
                  %s191 = sphi %s156, %s156
                  %s192 = sphi %s154, %s154
                $region50: #{decoder_up_block.4} parent=46 // loop_header_branch
                  %189 = sbr.rel (%p187) target = $region54
                $region51: #{decoder_up_block.4} parent=46 // loop_body
                  %v193 = vld [vmem:[%s191] sm:$0xff]
                  %194 = vst [vmem:[%s192] sm:$0xff] %v193
                  %v195 = vld [vmem:[%s191 + $0x20] sm:$0xff]
                  %196 = vst [vmem:[%s192 + $0x8] sm:$0xff] %v195
                  %v197 = vld [vmem:[%s191 + $0x40] sm:$0xff]
                  %198 = vst [vmem:[%s192 + $0x10] sm:$0xff] %v197
                  %v199 = vld [vmem:[%s191 + $0x60] sm:$0xff]
                  %200 = vst [vmem:[%s192 + $0x18] sm:$0xff] %v199
                  %v201 = vld [vmem:[%s191 + $0x80] sm:$0xff]
                  %202 = vst [vmem:[%s192 + $0x20] sm:$0xff] %v201
                $region52: #{decoder_up_block.4} parent=46 // loop_footer
                  %s190 = sadd.s32 1, %s186
                $region53: #{decoder_up_block.4} parent=46 // loop_footer_branch
                  %185 = sbr.rel target = $region49
                $region54: #{decoder_up_block.4} parent=46 // loop_exit
                  _
              $region47: #{decoder_up_block.4} parent=31 // pred_fallthru
                _
              // Predicated region
              $region55: #{decoder_up_block.4} parent=31 // pred_check
                _
              $region56: #{decoder_up_block.4} parent=31 // pred_check_branch
                %204 = sbr.rel target = $region58
              $region57: #{decoder_up_block.4} parent=31 // pred_region
                _
              $region58: #{decoder_up_block.4} parent=31 // pred_fallthru
                _
            $region32: #{decoder_up_block.4} parent=27 // pred_fallthru
              _
            // Predicated region
            $region33: #{decoder_up_block.4} parent=27 // pred_check
              _
            $region34: #{decoder_up_block.4} parent=27 // pred_check_branch
              %162 = sbr.rel target = $region36
            $region35: #{decoder_up_block.4} parent=27 // pred_region
              %s164 = ssub.s32 256, 1
              loop: start=0, step=1, limit=1
              $region37: #{decoder_up_block.4} parent=35 // loop_pre_header
                _
              $region38: #{decoder_up_block.4} parent=35 // loop_header
                %s166 = sphi 0, %s170
                %p167 = scmp.ge.s32.totalorder %s166, 1
                %s171 = sphi %s156, %s156
                %s172 = sphi %s154, %s154
              $region39: #{decoder_up_block.4} parent=35 // loop_header_branch
                %169 = sbr.rel (%p167) target = $region43
              $region40: #{decoder_up_block.4} parent=35 // loop_body
                %v173 = vld [vmem:[%s171] sm:%s164]
                %174 = vst [vmem:[%s172] sm:%s164] %v173
                %v175 = vld [vmem:[%s171 + $0x20] sm:%s164]
                %176 = vst [vmem:[%s172 + $0x8] sm:%s164] %v175
                %v177 = vld [vmem:[%s171 + $0x40] sm:%s164]
                %178 = vst [vmem:[%s172 + $0x10] sm:%s164] %v177
                %v179 = vld [vmem:[%s171 + $0x60] sm:%s164]
                %180 = vst [vmem:[%s172 + $0x18] sm:%s164] %v179
                %v181 = vld [vmem:[%s171 + $0x80] sm:%s164]
                %182 = vst [vmem:[%s172 + $0x20] sm:%s164] %v181
              $region41: #{decoder_up_block.4} parent=35 // loop_footer
                %s170 = sadd.s32 1, %s166
              $region42: #{decoder_up_block.4} parent=35 // loop_footer_branch
                %165 = sbr.rel target = $region38
              $region43: #{decoder_up_block.4} parent=35 // loop_exit
                _
            $region36: #{decoder_up_block.4} parent=27 // pred_fallthru
              _
          $region28: #{decoder_up_block.4} parent=23 // pred_fallthru
            _
          %205 = vnop
        $region24: #{decoder_up_block.4} parent=19 // pred_fallthru
          _
      $region20: #{decoder_up_block.4} parent=5 // pred_fallthru
        _
      %p206 = scmp.le.s32.totalorder 1, %s11
      %p207 = scmp.lt.s32.totalorder %s11, 5
      %p208 = pnand %p206, %p207
      %p209 = pneg %p208
      // Predicated region
      $region59: #{decoder_up_block.4} parent=5 // pred_check
        _
      $region60: #{decoder_up_block.4} parent=5 // pred_check_branch
        %211 = sbr.rel (%p208) target = $region62
      $region61: #{decoder_up_block.4} parent=5 // pred_region
        %s212 = ssub.s32 %s11, 1
        %s213 = sand.u32 %s24, 1
        %s214 = sand.u32 %s24, 1
        %s215 = smul.addr %s214, 40
        %s216 = scalar_lea.vmem [#allocation2], %s215
        // Predicated region
        $region63: #{decoder_up_block.4} parent=61 // pred_check
          %p217 = pneg %p37
        $region64: #{decoder_up_block.4} parent=61 // pred_check_branch
          %219 = sbr.rel (%p217) target = $region66
        $region65: #{decoder_up_block.4} parent=61 // pred_region
          _
        $region66: #{decoder_up_block.4} parent=61 // pred_fallthru
          _
        %s220 = sand.u32 %s24, 1
        %s221 = sand.u32 %s24, 1
        %s222 = smul.addr %s221, 40
        %s223 = scalar_lea.vmem [#allocation2], %s222
        %p224 = pneg %p37
        %p225 = pneg %p34
        %p226 = pneg %p58
        %p227 = pneg %p55
        %p228 = pneg %p84
        %p229 = pneg %p81
        %p230 = scmp.lt.s32.totalorder %s16, 3
        %s231 = scalar_select %p230, %s16, 3
        %s232 = smul.addr %s231, 8
        %s233 = scalar_lea.vmem %s2, %s232
        %p234 = pneg %p105
        %p235 = pneg %p102
        %p236 = pneg %p126
        %p237 = pneg %p123
        %p238 = scmp.lt.s32.totalorder %s16, 3
        %s239 = scalar_select %p238, %s16, 3
        %s240 = smul.addr %s239, 8
        %s241 = scalar_lea.vmem %s2, %s240
        %v242 = vld [vmem:[%s1] sm:$0xff]
        %v243 = vld [vmem:[%s216] sm:$0xff]
        %v244 = vld [vmem:[%s216 + $0x8] sm:$0xff]
        %v245 = vld [vmem:[%s216 + $0x10] sm:$0xff]
        %v246 = vld [vmem:[%s216 + $0x18] sm:$0xff]
        %v247 = vld [vmem:[%s216 + $0x20] sm:$0xf]
        %vm248 = vcmask 293888
        %v250 = vsel %vm248, %v242, 0
        %vm252 = vcmask 1043456
        %v254 = vsel %vm252, %v247, 0
        %256 = vmatprep.subr.mxu0 0.0
        %257 = vmatpush1.msra.mxu0 0.0
        %258 = vmatprep.subr.mxu0 0.0
        %259 = vmatpush1.msra.mxu0 0.0
        %260 = vmatprep.subr.mxu0 0.0
        %261 = vmatpush1.msra.mxu0 0.0
        %262 = vmatprep.subr.mxu0 0.0
        %263 = vmatpush1.msra.mxu0 0.0
        %264 = vmatprep.subr.mxu0 0.0
        %265 = vmatpush1.msra.mxu0 0.0
        %266 = vmatprep.subr.mxu0 0.0
        %267 = vmatpush1.msra.mxu0 0.0
        %268 = vmatprep.subr.mxu0 0.0
        %269 = vmatpush1.msra.mxu0 0.0
        %270 = vmatprep.subr.mxu0 0.0
        %271 = vmatpush1.msra.mxu0 0.0
        %272 = vmatprep.subr.mxu0 0.0
        %273 = vmatpush1.msra.mxu0 0.0
        %274 = vmatprep.subr.mxu0 0.0
        %275 = vmatpush1.msra.mxu0 0.0
        %276 = vmatprep.subr.mxu0 0.0
        %277 = vmatpush1.msra.mxu0 0.0
        %278 = vmatprep.subr.mxu0 0.0
        %279 = vmatpush1.msra.mxu0 %v254
        %280 = vmatprep.subr.mxu0 0.0
        %281 = vmatpush1.msra.mxu0 %v246
        %282 = vmatprep.subr.mxu0 0.0
        %283 = vmatpush1.msra.mxu0 %v245
        %284 = vmatprep.subr.mxu0 0.0
        %285 = vmatpush1.msra.mxu0 %v244
        %286 = vmatprep.subr.mxu0 0.0
        %287 = vmatpush1.msra.mxu0 %v243
        %288 = vmatprep.subr.mxu0 0.0
        %289 = vmatpush2.msra.mxu0 0.0
        %290 = vmatprep.subr.mxu0 0.0
        %291 = vmatpush2.msra.mxu0 0.0
        %292 = vmatprep.subr.mxu0 0.0
        %293 = vmatpush2.msra.mxu0 0.0
        %294 = vmatprep.subr.mxu0 0.0
        %295 = vmatpush2.msra.mxu0 0.0
        %296 = vmatprep.subr.mxu0 0.0
        %297 = vmatpush2.msra.mxu0 0.0
        %298 = vmatprep.subr.mxu0 0.0
        %299 = vmatpush2.msra.mxu0 0.0
        %300 = vmatprep.subr.mxu0 0.0
        %301 = vmatpush2.msra.mxu0 0.0
        %302 = vmatprep.subr.mxu0 0.0
        %303 = vmatpush2.msra.mxu0 0.0
        %304 = vmatprep.subr.mxu0 0.0
        %305 = vmatpush2.msra.mxu0 0.0
        %306 = vmatprep.subr.mxu0 0.0
        %307 = vmatpush2.msra.mxu0 0.0
        %308 = vmatprep.subr.mxu0 0.0
        %309 = vmatpush2.msra.mxu0 0.0
        %310 = vmatprep.subr.mxu0 0.0
        %311 = vmatpush2.msra.mxu0 0.0
        %312 = vmatprep.subr.mxu0 0.0
        %313 = vmatpush2.msra.mxu0 0.0
        %314 = vmatprep.subr.mxu0 0.0
        %315 = vmatpush2.msra.mxu0 0.0
        %316 = vmatprep.subr.mxu0 0.0
        %317 = vmatpush2.msra.mxu0 0.0
        %318 = vmatprep.subr.mxu0 0.0
        %319 = vmatpush2.msra.mxu0 0.0
        %320 = vmatprep.mubr.f32.mxu0 0.0
        %321 = vmatmul.mubr.f32.gmra.mxu0 %v250
        %v322 = vpop.f32.mrf.mxu0
        %v323 = vadd.f32 0.0, %v322
        %v324 = vpop.f32.mrf.mxu0
        %325 = vdwg.mxu0
        %326 = vst [vmem:[%s241] sm:$0xff] %v323
        %p327 = scmp.eq.s32.totalorder %s16, 0
        // Predicated region
        $region67: #{decoder_up_block.4} parent=61 // pred_check
          %p328 = pneg %p327
        $region68: #{decoder_up_block.4} parent=61 // pred_check_branch
          %330 = sbr.rel (%p328) target = $region70
        $region69: #{decoder_up_block.4} parent=61 // pred_region
          %vm331 = vcmask 7168
          %332 = vst.msk [vmem:[%s3] sm:$0xff] %vm331, 0.0
          %333 = vst.msk [vmem:[%s4] sm:$0xff] %vm331, 0.0
        $region70: #{decoder_up_block.4} parent=61 // pred_fallthru
          _
        %v334 = vld [vmem:[%s3] sm:$0xff]
        %335 = vadd.xlane.f32.xlu0 %v323
        %v336 = vpop.xlane.xlu0 %335
        %v337 = vadd.f32 %v334, %v336
        %vm338 = vcmask 7168
        %339 = vst.msk [vmem:[%s3] sm:$0xff] %vm338, %v337
        %v340 = vld [vmem:[%s4] sm:$0xff]
        %v341 = vmul.f32 %v323, %v323
        %342 = vadd.xlane.f32.xlu0 %v341
        %v343 = vpop.xlane.xlu0 %342
        %v344 = vadd.f32 %v340, %v343
        %345 = vst.msk [vmem:[%s4] sm:$0xff] %vm338, %v344
        %p346 = scmp.lt.s32.totalorder %s16, 3
        %s347 = scalar_select %p346, %s16, 3
        %s348 = smul.addr %s347, 8
        %s349 = scalar_lea.vmem %s2, %s348
        // Predicated region
        $region71: #{decoder_up_block.4} parent=61 // pred_check
          %p350 = pneg %p81
        $region72: #{decoder_up_block.4} parent=61 // pred_check_branch
          %352 = sbr.rel (%p350) target = $region74
        $region73: #{decoder_up_block.4} parent=61 // pred_region
          _
        $region74: #{decoder_up_block.4} parent=61 // pred_fallthru
          _
        // Predicated region
        $region75: #{decoder_up_block.4} parent=61 // pred_check
          %p353 = pneg %p102
        $region76: #{decoder_up_block.4} parent=61 // pred_check_branch
          %355 = sbr.rel (%p353) target = $region78
        $region77: #{decoder_up_block.4} parent=61 // pred_region
          _
        $region78: #{decoder_up_block.4} parent=61 // pred_fallthru
          _
        // Predicated region
        $region79: #{decoder_up_block.4} parent=61 // pred_check
          %p356 = pneg %p123
        $region80: #{decoder_up_block.4} parent=61 // pred_check_branch
          %358 = sbr.rel (%p356) target = $region82
        $region81: #{decoder_up_block.4} parent=61 // pred_region
          _
        $region82: #{decoder_up_block.4} parent=61 // pred_fallthru
          _
        // Predicated region
        $region83: #{decoder_up_block.4} parent=61 // pred_check
          %p359 = pneg %p102
        $region84: #{decoder_up_block.4} parent=61 // pred_check_branch
          %361 = sbr.rel (%p359) target = $region86
        $region85: #{decoder_up_block.4} parent=61 // pred_region
          _
        $region86: #{decoder_up_block.4} parent=61 // pred_fallthru
          _
        // Predicated region
        $region87: #{decoder_up_block.4} parent=61 // pred_check
          %p362 = pneg %p123
        $region88: #{decoder_up_block.4} parent=61 // pred_check_branch
          %364 = sbr.rel (%p362) target = $region90
        $region89: #{decoder_up_block.4} parent=61 // pred_region
          _
        $region90: #{decoder_up_block.4} parent=61 // pred_fallthru
          _
      $region62: #{decoder_up_block.4} parent=5 // pred_fallthru
        _
      %p365 = scmp.le.s32.totalorder 2, %s11
      // Predicated region
      $region91: #{decoder_up_block.4} parent=5 // pred_check
        %p366 = pneg %p365
      $region92: #{decoder_up_block.4} parent=5 // pred_check_branch
        %368 = sbr.rel (%p366) target = $region94
      $region93: #{decoder_up_block.4} parent=5 // pred_region
        %s369 = ssub.s32 %s11, 2
        // Predicated region
        $region95: #{decoder_up_block.4} parent=93 // pred_check
          %p370 = pneg %p87
        $region96: #{decoder_up_block.4} parent=93 // pred_check_branch
          %372 = sbr.rel (%p370) target = $region98
        $region97: #{decoder_up_block.4} parent=93 // pred_region
          %p373 = scmp.lt.s32.totalorder %s17, 3
          %s374 = scalar_select %p373, %s17, 3
          %s375 = smul.addr %s374, 8
          %s376 = scalar_lea.vmem %s2, %s375
        $region98: #{decoder_up_block.4} parent=93 // pred_fallthru
          _
      $region94: #{decoder_up_block.4} parent=5 // pred_fallthru
        _
    $region6: #{decoder_up_block.4} parent=1 // loop_footer
      %s15 = sadd.s32 1, %s11
    $region7: #{decoder_up_block.4} parent=1 // loop_footer_branch
      %10 = sbr.rel target = $region3
    $region8: #{decoder_up_block.4} parent=1 // loop_exit
      _

// kernel: squeeze.24
$region0: #{squeeze.24}
  %s0 = inlined_call_operand.vmem [shape: f32[16], index: 0, kind: input, shape index: {}]
  %s1 = inlined_call_operand.vmem [shape: f32[4,4], index: 1, kind: output, shape index: {}]
  $region1: #{squeeze.24} parent=0
    #allocation0 [shape = 'u8[4096]{0}', space=vmem, size = 0x1000, scoped, tag = 'scoped mem for output reshape']
    #allocation1 [shape = 'u8[4096]{0}', space=vmem, size = 0x1000, scoped, tag = 'scoped mem for input reshape']
    %s3 = sshll.u32 1, 1
    %s4 = ssub.s32 %s3, 1
    %v5 = vld [vmem:[%s0] sm:%s4]
    %6 = vst [vmem:[#allocation1] sm:%s4] %v5
    %v7 = vld [vmem:[#allocation1] sm:$0x1]
    %vm8 = vcmask 31744
    %9 = vst.msk [vmem:[#allocation0] sm:$0x1] %vm8, %v7
    %v10 = vld [vmem:[#allocation1] sm:$0x1]
    %11 = vrot.lane.b32.xlu0 %v10, 124
    %v12 = vpop.permute.xlu0 %11
    %vm13 = vcmask 31744
    %s14 = scalar_lea.vmem [#allocation0], 1
    %15 = vst.msk [vmem:[%s14] sm:$0x1] %vm13, %v12
    %v16 = vld [vmem:[#allocation1] sm:$0x1]
    %17 = vrot.lane.b32.xlu0 %v16, 120
    %v18 = vpop.permute.xlu0 %17
    %vm19 = vcmask 31744
    %s20 = scalar_lea.vmem [#allocation0], 2
    %21 = vst.msk [vmem:[%s20] sm:$0x1] %vm19, %v18
    %v22 = vld [vmem:[#allocation1] sm:$0x1]
    %23 = vrot.lane.b32.xlu0 %v22, 116
    %v24 = vpop.permute.xlu0 %23
    %vm25 = vcmask 31744
    %s26 = scalar_lea.vmem [#allocation0], 3
    %27 = vst.msk [vmem:[%s26] sm:$0x1] %vm25, %v24
    %s29 = sshll.u32 1, 4
    %s30 = ssub.s32 %s29, 1
    %v32 = vld [vmem:[#allocation0] sm:%s30]
    %s33 = sshll.u32 1, 4
    %s34 = ssub.s32 %s33, 1
    %35 = vst [vmem:[%s1] sm:%s34] %v32

// kernel: tile.13
$region0: #{tile.13}
  #allocation0 [shape = 's32[1]{0}', space=sflag, size = 0x4, scoped, tag = 'scoped memory for tile.13']
  %s0 = inlined_call_operand.vmem [shape: f32[4], index: 0, kind: input, shape index: {}]
  %s1 = inlined_call_operand.vmem [shape: f32[4,4], index: 1, kind: output, shape index: {}]
  // Predicated region
  $region2: #{tile.13} parent=0 // pred_check
    _
  $region3: #{tile.13} parent=0 // pred_check_branch
    %3 = sbr.rel (0) target = $region5
  $region4: #{tile.13} parent=0 // pred_region
    _
  $region5: #{tile.13} parent=0 // pred_fallthru
    _
  %v4 = vld [vmem:[%s0] ss:$0 sm:$0xff]
  %5 = vst [vmem:[%s1] sm:$0xf] %v4

// kernel: tile.0
$region0: #{tile.0}
  %s0 = inlined_call_operand.vmem [shape: f32[4,4], index: 0, kind: input, shape index: {}]
  %s1 = inlined_call_operand.vmem [shape: f32[16,1], index: 1, kind: output, shape index: {}]
  $region1: #{tile.0} parent=0
    #allocation0 [shape = 'u8[4096]{0}', space=vmem, size = 0x1000, scoped, tag = 'scoped mem for input reshape']
    %s3 = sshll.u32 1, 4
    %s4 = ssub.s32 %s3, 1
    %v5 = vld [vmem:[%s0] sm:%s4]
    %6 = vst [vmem:[#allocation0] sm:%s4] %v5
    %v7 = vld [vmem:[#allocation0] sm:$0xf]
    %vm8 = vcmask 7168
    %9 = vst.msk [vmem:[%s1] ss:$4 sm:$0xf] %vm8, %v7
    %v10 = vld [vmem:[#allocation0] sm:$0xf]
    %11 = vrot.lane.b32.xlu0 %v10, 127
    %v12 = vpop.permute.xlu0 %11
    %vm13 = vcmask 7168
    %s14 = scalar_lea.vmem %s1, 1
    %15 = vst.msk [vmem:[%s14] ss:$4 sm:$0xf] %vm13, %v12
    %v16 = vld [vmem:[#allocation0] sm:$0xf]
    %17 = vrot.lane.b32.xlu0 %v16, 126
    %v18 = vpop.permute.xlu0 %17
    %vm19 = vcmask 7168
    %s20 = scalar_lea.vmem %s1, 2
    %21 = vst.msk [vmem:[%s20] ss:$4 sm:$0xf] %vm19, %v18
    %v22 = vld [vmem:[#allocation0] sm:$0xf]
    %23 = vrot.lane.b32.xlu0 %v22, 125
    %v24 = vpop.permute.xlu0 %23
    %vm25 = vcmask 7168
    %s26 = scalar_lea.vmem %s1, 3
    %27 = vst.msk [vmem:[%s26] ss:$4 sm:$0xf] %vm25, %v24

// kernel: decoder_up_block.6
$region0: #{decoder_up_block.6}
  #allocation0 [shape = 'u32[]', space=smem, size = 0x4, offset = 0x4, fixed_abs, tag = 'smem constant byte address 0x4 - core index']
  #allocation1 [shape = 'u32[144,128]{1,0:T(1,128)}', space=vmem, size = 0x12000, scoped, tag = 'internal scratch']
  %s0 = inlined_call_operand.vmem [shape: f32[32,512], index: 0, kind: input, shape index: {}]
  %s1 = inlined_call_operand.vmem [shape: f32[16,32], index: 1, kind: input, shape index: {}]
  %s2 = inlined_call_operand.vmem [shape: f32[16,512], index: 2, kind: output, shape index: {0}]
  %s3 = inlined_call_operand.vmem [shape: f32[16,1], index: 3, kind: output, shape index: {1}]
  %s4 = inlined_call_operand.vmem [shape: f32[16,1], index: 4, kind: output, shape index: {2}]
  %5 = xla_tuple %s2, %s3, %s4
  %s6 = sld [smem:[#allocation0]]
  $region133: #{decoder_up_block.6} parent=0
    _
  %s8 = ssub.s32 1, %s6
  %s9 = scalar_select 0, %s8, %s6
  $region1: #{decoder_up_block.6} parent=0
    #allocation2 [shape = 'u8[32768]{0}', space=vmem, size = 0x8000, scoped, tag = 'input window, operand 0']
    #allocation3 [shape = 'u8[16384]{0}', space=vmem, size = 0x4000, scoped, tag = 'output window, operand 0']
    loop: start=0, step=1, limit=6
    $region2: #{decoder_up_block.6} parent=1 // loop_pre_header
      _
    $region3: #{decoder_up_block.6} parent=1 // loop_header
      %s11 = sphi 0, %s15
      %p12 = scmp.ge.s32.totalorder %s11, 6
      %s21 = sphi 0, %s23
      %s24 = sphi 0, %s21
      %s25 = sphi 0, %s24
      %s41 = sphi 0, %s25
      %s45 = sphi 0, %s45
      %s47 = sphi 0, %s45
      %s48 = sphi 0, %s47
      %s62 = sphi 0, %s48
      %s68 = sphi 0, %s70
      %s71 = sphi 0, %s68
      %s72 = sphi 0, %s71
      %s88 = sphi 0, %s72
      %s92 = sphi 0, %s92
      %s94 = sphi 0, %s92
      %s95 = sphi 0, %s94
      %s109 = sphi 0, %s95
      %s113 = sphi 0, %s113
      %s115 = sphi 0, %s113
      %s116 = sphi 0, %s115
      %s130 = sphi 0, %s116
    $region4: #{decoder_up_block.6} parent=1 // loop_header_branch
      %14 = sbr.rel (%p12) target = $region8
    $region5: #{decoder_up_block.6} parent=1 // loop_body
      %s16 = ssub.s32 %s11, 1
      %s17 = ssub.s32 %s11, 2
      %s18 = sadd.s32 %s11, 1
      %s19 = ssub.s32 %s11, %s18
      %p20 = scmp.eq.s32.totalorder %s19, 0
      %s22 = sadd.s32 %s21, 1
      %s23 = scalar_select %p20, %s21, %s22
      %p26 = pneg %p20
      %p27 = scmp.eq.s32.totalorder %s11, 3
      %p28 = por %p26, %p27
      %p29 = scmp.ne.s32.totalorder %s21, %s24
      %p30 = scmp.eq.s32.totalorder %s11, 0
      %p31 = por %p29, %p30
      %p32 = scmp.ne.s32.totalorder %s21, %s24
      %p33 = scmp.eq.s32.totalorder %s16, 3
      %p34 = por %p32, %p33
      %p35 = scmp.ne.s32.totalorder %s24, %s25
      %p36 = scmp.eq.s32.totalorder %s16, 0
      %p37 = por %p35, %p36
      %p38 = scmp.ne.s32.totalorder %s24, %s25
      %p39 = scmp.eq.s32.totalorder %s17, 3
      %p40 = por %p38, %p39
      %p42 = scmp.ne.s32.totalorder %s25, %s41
      %p43 = scmp.eq.s32.totalorder %s17, 0
      %p44 = por %p42, %p43
      %s46 = sadd.s32 %s45, 1
      %p49 = scmp.eq.s32.totalorder %s11, 3
      %p50 = scmp.ne.s32.totalorder %s45, %s47
      %p51 = scmp.eq.s32.totalorder %s11, 0
      %p52 = por %p50, %p51
      %p53 = scmp.ne.s32.totalorder %s45, %s47
      %p54 = scmp.eq.s32.totalorder %s16, 3
      %p55 = por %p53, %p54
      %p56 = scmp.ne.s32.totalorder %s47, %s48
      %p57 = scmp.eq.s32.totalorder %s16, 0
      %p58 = por %p56, %p57
      %p59 = scmp.ne.s32.totalorder %s47, %s48
      %p60 = scmp.eq.s32.totalorder %s17, 3
      %p61 = por %p59, %p60
      %p63 = scmp.ne.s32.totalorder %s48, %s62
      %p64 = scmp.eq.s32.totalorder %s17, 0
      %p65 = por %p63, %p64
      %s66 = ssub.s32 %s11, %s18
      %p67 = scmp.eq.s32.totalorder %s66, 0
      %s69 = sadd.s32 %s68, 1
      %s70 = scalar_select %p67, %s68, %s69
      %p73 = pneg %p67
      %p74 = scmp.eq.s32.totalorder %s11, 3
      %p75 = por %p73, %p74
      %p76 = scmp.ne.s32.totalorder %s68, %s71
      %p77 = scmp.eq.s32.totalorder %s11, 0
      %p78 = por %p76, %p77
      %p79 = scmp.ne.s32.totalorder %s68, %s71
      %p80 = scmp.eq.s32.totalorder %s16, 3
      %p81 = por %p79, %p80
      %p82 = scmp.ne.s32.totalorder %s71, %s72
      %p83 = scmp.eq.s32.totalorder %s16, 0
      %p84 = por %p82, %p83
      %p85 = scmp.ne.s32.totalorder %s71, %s72
      %p86 = scmp.eq.s32.totalorder %s17, 3
      %p87 = por %p85, %p86
      %p89 = scmp.ne.s32.totalorder %s72, %s88
      %p90 = scmp.eq.s32.totalorder %s17, 0
      %p91 = por %p89, %p90
      %s93 = sadd.s32 %s92, 1
      %p96 = scmp.eq.s32.totalorder %s11, 3
      %p97 = scmp.ne.s32.totalorder %s92, %s94
      %p98 = scmp.eq.s32.totalorder %s11, 0
      %p99 = por %p97, %p98
      %p100 = scmp.ne.s32.totalorder %s92, %s94
      %p101 = scmp.eq.s32.totalorder %s16, 3
      %p102 = por %p100, %p101
      %p103 = scmp.ne.s32.totalorder %s94, %s95
      %p104 = scmp.eq.s32.totalorder %s16, 0
      %p105 = por %p103, %p104
      %p106 = scmp.ne.s32.totalorder %s94, %s95
      %p107 = scmp.eq.s32.totalorder %s17, 3
      %p108 = por %p106, %p107
      %p110 = scmp.ne.s32.totalorder %s95, %s109
      %p111 = scmp.eq.s32.totalorder %s17, 0
      %p112 = por %p110, %p111
      %s114 = sadd.s32 %s113, 1
      %p117 = scmp.eq.s32.totalorder %s11, 3
      %p118 = scmp.ne.s32.totalorder %s113, %s115
      %p119 = scmp.eq.s32.totalorder %s11, 0
      %p120 = por %p118, %p119
      %p121 = scmp.ne.s32.totalorder %s113, %s115
      %p122 = scmp.eq.s32.totalorder %s16, 3
      %p123 = por %p121, %p122
      %p124 = scmp.ne.s32.totalorder %s115, %s116
      %p125 = scmp.eq.s32.totalorder %s16, 0
      %p126 = por %p124, %p125
      %p127 = scmp.ne.s32.totalorder %s115, %s116
      %p128 = scmp.eq.s32.totalorder %s17, 3
      %p129 = por %p127, %p128
      %p131 = scmp.ne.s32.totalorder %s116, %s130
      %p132 = scmp.eq.s32.totalorder %s17, 0
      %p133 = por %p131, %p132
      %p134 = scmp.le.s32.totalorder 1, %s11
      %p135 = scmp.lt.s32.totalorder %s11, 5
      %p136 = pnand %p134, %p135
      %p137 = pneg %p136
      // Predicated region
      $region9: #{decoder_up_block.6} parent=5 // pred_check
        _
      $region10: #{decoder_up_block.6} parent=5 // pred_check_branch
        %139 = sbr.rel (%p136) target = $region12
      $region11: #{decoder_up_block.6} parent=5 // pred_region
        %s140 = ssub.s32 %s11, 1
        // Predicated region
        $region13: #{decoder_up_block.6} parent=11 // pred_check
          %p141 = pneg %p58
        $region14: #{decoder_up_block.6} parent=11 // pred_check_branch
          %143 = sbr.rel (%p141) target = $region16
        $region15: #{decoder_up_block.6} parent=11 // pred_region
          _
        $region16: #{decoder_up_block.6} parent=11 // pred_fallthru
          _
      $region12: #{decoder_up_block.6} parent=5 // pred_fallthru
        _
      %p144 = scmp.lt.s32.totalorder %s11, 4
      // Predicated region
      $region17: #{decoder_up_block.6} parent=5 // pred_check
        %p145 = pneg %p144
      $region18: #{decoder_up_block.6} parent=5 // pred_check_branch
        %147 = sbr.rel (%p145) target = $region20
      $region19: #{decoder_up_block.6} parent=5 // pred_region
        // Predicated region
        $region21: #{decoder_up_block.6} parent=19 // pred_check
          %p148 = pneg %p31
        $region22: #{decoder_up_block.6} parent=19 // pred_check_branch
          %150 = sbr.rel (%p148) target = $region24
        $region23: #{decoder_up_block.6} parent=19 // pred_region
          %s151 = sand.u32 %s21, 1
          %s152 = sand.u32 %s21, 1
          %s153 = smul.addr %s152, 32
          %s154 = scalar_lea.vmem [#allocation2], %s153
          %s155 = smul.addr %s11, 8
          %s156 = scalar_lea.vmem %s0, %s155
          // Predicated region
          $region25: #{decoder_up_block.6} parent=23 // pred_check
            _
          $region26: #{decoder_up_block.6} parent=23 // pred_check_branch
            %158 = sbr.rel (0) target = $region28
          $region27: #{decoder_up_block.6} parent=23 // pred_region
            // Predicated region
            $region29: #{decoder_up_block.6} parent=27 // pred_check
              _
            $region30: #{decoder_up_block.6} parent=27 // pred_check_branch
              %160 = sbr.rel (0) target = $region32
            $region31: #{decoder_up_block.6} parent=27 // pred_region
              // Predicated region
              $region44: #{decoder_up_block.6} parent=31 // pred_check
                _
              $region45: #{decoder_up_block.6} parent=31 // pred_check_branch
                %182 = sbr.rel (0) target = $region47
              $region46: #{decoder_up_block.6} parent=31 // pred_region
                loop: start=0, step=1, limit=1
                $region48: #{decoder_up_block.6} parent=46 // loop_pre_header
                  _
                $region49: #{decoder_up_block.6} parent=46 // loop_header
                  %s184 = sphi 0, %s188
                  %p185 = scmp.ge.s32.totalorder %s184, 1
                  %s189 = sphi %s156, %s156
                  %s190 = sphi %s154, %s154
                $region50: #{decoder_up_block.6} parent=46 // loop_header_branch
                  %187 = sbr.rel (%p185) target = $region54
                $region51: #{decoder_up_block.6} parent=46 // loop_body
                  %v191 = vld [vmem:[%s189] sm:$0xff]
                  %192 = vst [vmem:[%s190] sm:$0xff] %v191
                  %v193 = vld [vmem:[%s189 + $0x20] sm:$0xff]
                  %194 = vst [vmem:[%s190 + $0x8] sm:$0xff] %v193
                  %v195 = vld [vmem:[%s189 + $0x40] sm:$0xff]
                  %196 = vst [vmem:[%s190 + $0x10] sm:$0xff] %v195
                  %v197 = vld [vmem:[%s189 + $0x60] sm:$0xff]
                  %198 = vst [vmem:[%s190 + $0x18] sm:$0xff] %v197
                $region52: #{decoder_up_block.6} parent=46 // loop_footer
                  %s188 = sadd.s32 1, %s184
                $region53: #{decoder_up_block.6} parent=46 // loop_footer_branch
                  %183 = sbr.rel target = $region49
                $region54: #{decoder_up_block.6} parent=46 // loop_exit
                  _
              $region47: #{decoder_up_block.6} parent=31 // pred_fallthru
                _
              // Predicated region
              $region55: #{decoder_up_block.6} parent=31 // pred_check
                _
              $region56: #{decoder_up_block.6} parent=31 // pred_check_branch
                %200 = sbr.rel target = $region58
              $region57: #{decoder_up_block.6} parent=31 // pred_region
                _
              $region58: #{decoder_up_block.6} parent=31 // pred_fallthru
                _
            $region32: #{decoder_up_block.6} parent=27 // pred_fallthru
              _
            // Predicated region
            $region33: #{decoder_up_block.6} parent=27 // pred_check
              _
            $region34: #{decoder_up_block.6} parent=27 // pred_check_branch
              %162 = sbr.rel target = $region36
            $region35: #{decoder_up_block.6} parent=27 // pred_region
              %s164 = ssub.s32 256, 1
              loop: start=0, step=1, limit=1
              $region37: #{decoder_up_block.6} parent=35 // loop_pre_header
                _
              $region38: #{decoder_up_block.6} parent=35 // loop_header
                %s166 = sphi 0, %s170
                %p167 = scmp.ge.s32.totalorder %s166, 1
                %s171 = sphi %s156, %s156
                %s172 = sphi %s154, %s154
              $region39: #{decoder_up_block.6} parent=35 // loop_header_branch
                %169 = sbr.rel (%p167) target = $region43
              $region40: #{decoder_up_block.6} parent=35 // loop_body
                %v173 = vld [vmem:[%s171] sm:%s164]
                %174 = vst [vmem:[%s172] sm:%s164] %v173
                %v175 = vld [vmem:[%s171 + $0x20] sm:%s164]
                %176 = vst [vmem:[%s172 + $0x8] sm:%s164] %v175
                %v177 = vld [vmem:[%s171 + $0x40] sm:%s164]
                %178 = vst [vmem:[%s172 + $0x10] sm:%s164] %v177
                %v179 = vld [vmem:[%s171 + $0x60] sm:%s164]
                %180 = vst [vmem:[%s172 + $0x18] sm:%s164] %v179
              $region41: #{decoder_up_block.6} parent=35 // loop_footer
                %s170 = sadd.s32 1, %s166
              $region42: #{decoder_up_block.6} parent=35 // loop_footer_branch
                %165 = sbr.rel target = $region38
              $region43: #{decoder_up_block.6} parent=35 // loop_exit
                _
            $region36: #{decoder_up_block.6} parent=27 // pred_fallthru
              _
          $region28: #{decoder_up_block.6} parent=23 // pred_fallthru
            _
          %201 = vnop
        $region24: #{decoder_up_block.6} parent=19 // pred_fallthru
          _
      $region20: #{decoder_up_block.6} parent=5 // pred_fallthru
        _
      %p202 = scmp.le.s32.totalorder 1, %s11
      %p203 = scmp.lt.s32.totalorder %s11, 5
      %p204 = pnand %p202, %p203
      %p205 = pneg %p204
      // Predicated region
      $region59: #{decoder_up_block.6} parent=5 // pred_check
        _
      $region60: #{decoder_up_block.6} parent=5 // pred_check_branch
        %207 = sbr.rel (%p204) target = $region62
      $region61: #{decoder_up_block.6} parent=5 // pred_region
        %s208 = ssub.s32 %s11, 1
        %s209 = sand.u32 %s24, 1
        %s210 = sand.u32 %s24, 1
        %s211 = smul.addr %s210, 32
        %s212 = scalar_lea.vmem [#allocation2], %s211
        // Predicated region
        $region63: #{decoder_up_block.6} parent=61 // pred_check
          %p213 = pneg %p37
        $region64: #{decoder_up_block.6} parent=61 // pred_check_branch
          %215 = sbr.rel (%p213) target = $region66
        $region65: #{decoder_up_block.6} parent=61 // pred_region
          _
        $region66: #{decoder_up_block.6} parent=61 // pred_fallthru
          _
        %s216 = sand.u32 %s24, 1
        %s217 = sand.u32 %s24, 1
        %s218 = smul.addr %s217, 32
        %s219 = scalar_lea.vmem [#allocation2], %s218
        %p220 = pneg %p37
        %p221 = pneg %p34
        %p222 = pneg %p58
        %p223 = pneg %p55
        %p224 = pneg %p84
        %p225 = pneg %p81
        %s226 = sand.u32 %s71, 1
        %s227 = sand.u32 %s71, 1
        %s228 = smul.addr %s227, 16
        %s229 = scalar_lea.vmem [#allocation3], %s228
        %p230 = pneg %p105
        %p231 = pneg %p102
        %p232 = pneg %p126
        %p233 = pneg %p123
        %v234 = vld [vmem:[%s1] sm:$0xff]
        %v235 = vld [vmem:[%s1 + $0x8] sm:$0xff]
        %v236 = vld [vmem:[%s212] sm:$0xff]
        %v237 = vld [vmem:[%s212 + $0x8] sm:$0xff]
        %v238 = vld [vmem:[%s212 + $0x10] sm:$0xff]
        %v239 = vld [vmem:[%s212 + $0x18] sm:$0xff]
        %vm240 = vcmask 261120
        %v242 = vsel %vm240, %v234, 0
        %v245 = vsel %vm240, %v235, 0
        %247 = vmatprep.subr.mxu0 0.0
        %248 = vmatpush1.msra.mxu0 0.0
        %249 = vmatprep.subr.mxu0 0.0
        %250 = vmatpush1.msra.mxu0 0.0
        %251 = vmatprep.subr.mxu0 0.0
        %252 = vmatpush1.msra.mxu0 0.0
        %253 = vmatprep.subr.mxu0 0.0
        %254 = vmatpush1.msra.mxu0 0.0
        %255 = vmatprep.subr.mxu0 0.0
        %256 = vmatpush1.msra.mxu0 0.0
        %257 = vmatprep.subr.mxu0 0.0
        %258 = vmatpush1.msra.mxu0 0.0
        %259 = vmatprep.subr.mxu0 0.0
        %260 = vmatpush1.msra.mxu0 0.0
        %261 = vmatprep.subr.mxu0 0.0
        %262 = vmatpush1.msra.mxu0 0.0
        %263 = vmatprep.subr.mxu0 0.0
        %264 = vmatpush1.msra.mxu0 0.0
        %265 = vmatprep.subr.mxu0 0.0
        %266 = vmatpush1.msra.mxu0 0.0
        %267 = vmatprep.subr.mxu0 0.0
        %268 = vmatpush1.msra.mxu0 0.0
        %269 = vmatprep.subr.mxu0 0.0
        %270 = vmatpush1.msra.mxu0 0.0
        %271 = vmatprep.subr.mxu0 0.0
        %272 = vmatpush1.msra.mxu0 %v239
        %273 = vmatprep.subr.mxu0 0.0
        %274 = vmatpush1.msra.mxu0 %v238
        %275 = vmatprep.subr.mxu0 0.0
        %276 = vmatpush1.msra.mxu0 %v237
        %277 = vmatprep.subr.mxu0 0.0
        %278 = vmatpush1.msra.mxu0 %v236
        %279 = vmatprep.subr.mxu0 0.0
        %280 = vmatpush2.msra.mxu0 0.0
        %281 = vmatprep.subr.mxu0 0.0
        %282 = vmatpush2.msra.mxu0 0.0
        %283 = vmatprep.subr.mxu0 0.0
        %284 = vmatpush2.msra.mxu0 0.0
        %285 = vmatprep.subr.mxu0 0.0
        %286 = vmatpush2.msra.mxu0 0.0
        %287 = vmatprep.subr.mxu0 0.0
        %288 = vmatpush2.msra.mxu0 0.0
        %289 = vmatprep.subr.mxu0 0.0
        %290 = vmatpush2.msra.mxu0 0.0
        %291 = vmatprep.subr.mxu0 0.0
        %292 = vmatpush2.msra.mxu0 0.0
        %293 = vmatprep.subr.mxu0 0.0
        %294 = vmatpush2.msra.mxu0 0.0
        %295 = vmatprep.subr.mxu0 0.0
        %296 = vmatpush2.msra.mxu0 0.0
        %297 = vmatprep.subr.mxu0 0.0
        %298 = vmatpush2.msra.mxu0 0.0
        %299 = vmatprep.subr.mxu0 0.0
        %300 = vmatpush2.msra.mxu0 0.0
        %301 = vmatprep.subr.mxu0 0.0
        %302 = vmatpush2.msra.mxu0 0.0
        %303 = vmatprep.subr.mxu0 0.0
        %304 = vmatpush2.msra.mxu0 0.0
        %305 = vmatprep.subr.mxu0 0.0
        %306 = vmatpush2.msra.mxu0 0.0
        %307 = vmatprep.subr.mxu0 0.0
        %308 = vmatpush2.msra.mxu0 0.0
        %309 = vmatprep.subr.mxu0 0.0
        %310 = vmatpush2.msra.mxu0 0.0
        %311 = vmatprep.mubr.f32.mxu0 0.0
        %312 = vmatmul.mubr.f32.gmra.mxu0 %v242
        %v313 = vpop.f32.mrf.mxu0
        %v314 = vadd.f32 0.0, %v313
        %v315 = vpop.f32.mrf.mxu0
        %316 = vmatprep.mubr.f32.mxu0 0.0
        %317 = vmatmul.mubr.f32.gmra.mxu0 %v245
        %v318 = vpop.f32.mrf.mxu0
        %v319 = vadd.f32 0.0, %v318
        %v320 = vpop.f32.mrf.mxu0
        %321 = vdwg.mxu0
        %322 = vst [vmem:[%s229] sm:$0xff] %v314
        %323 = vst [vmem:[%s229 + $0x8] sm:$0xff] %v319
        %p324 = scmp.eq.s32.totalorder %s16, 0
        // Predicated region
        $region67: #{decoder_up_block.6} parent=61 // pred_check
          %p325 = pneg %p324
        $region68: #{decoder_up_block.6} parent=61 // pred_check_branch
          %327 = sbr.rel (%p325) target = $region70
        $region69: #{decoder_up_block.6} parent=61 // pred_region
          %vm328 = vcmask 7168
          %329 = vst.msk [vmem:[%s3] sm:$0xff] %vm328, 0.0
          %330 = vst.msk [vmem:[%s3 + $0x8] sm:$0xff] %vm328, 0.0
          %331 = vst.msk [vmem:[%s4] sm:$0xff] %vm328, 0.0
          %332 = vst.msk [vmem:[%s4 + $0x8] sm:$0xff] %vm328, 0.0
        $region70: #{decoder_up_block.6} parent=61 // pred_fallthru
          _
        %v333 = vld [vmem:[%s3] sm:$0xff]
        %v334 = vld [vmem:[%s3 + $0x8] sm:$0xff]
        %335 = vadd.xlane.f32.xlu0 %v314
        %v336 = vpop.xlane.xlu0 %335
        %337 = vadd.xlane.f32.xlu0 %v319
        %v338 = vpop.xlane.xlu0 %337
        %v339 = vadd.f32 %v333, %v336
        %v340 = vadd.f32 %v334, %v338
        %vm341 = vcmask 7168
        %342 = vst.msk [vmem:[%s3] sm:$0xff] %vm341, %v339
        %343 = vst.msk [vmem:[%s3 + $0x8] sm:$0xff] %vm341, %v340
        %v344 = vld [vmem:[%s4] sm:$0xff]
        %v345 = vld [vmem:[%s4 + $0x8] sm:$0xff]
        %v346 = vmul.f32 %v314, %v314
        %v347 = vmul.f32 %v319, %v319
        %348 = vadd.xlane.f32.xlu0 %v346
        %v349 = vpop.xlane.xlu0 %348
        %350 = vadd.xlane.f32.xlu0 %v347
        %v351 = vpop.xlane.xlu0 %350
        %v352 = vadd.f32 %v344, %v349
        %v353 = vadd.f32 %v345, %v351
        %354 = vst.msk [vmem:[%s4] sm:$0xff] %vm341, %v352
        %355 = vst.msk [vmem:[%s4 + $0x8] sm:$0xff] %vm341, %v353
        %s356 = sand.u32 %s71, 1
        %s357 = sand.u32 %s71, 1
        %s358 = smul.addr %s357, 16
        %s359 = scalar_lea.vmem [#allocation3], %s358
        // Predicated region
        $region71: #{decoder_up_block.6} parent=61 // pred_check
          %p360 = pneg %p81
        $region72: #{decoder_up_block.6} parent=61 // pred_check_branch
          %362 = sbr.rel (%p360) target = $region74
        $region73: #{decoder_up_block.6} parent=61 // pred_region
          %s363 = smul.addr %s16, 8
          %s364 = scalar_lea.vmem %s2, %s363
          // Predicated region
          $region75: #{decoder_up_block.6} parent=73 // pred_check
            _
          $region76: #{decoder_up_block.6} parent=73 // pred_check_branch
            %366 = sbr.rel (0) target = $region78
          $region77: #{decoder_up_block.6} parent=73 // pred_region
            // Predicated region
            $region79: #{decoder_up_block.6} parent=77 // pred_check
              _
            $region80: #{decoder_up_block.6} parent=77 // pred_check_branch
              %368 = sbr.rel (0) target = $region82
            $region81: #{decoder_up_block.6} parent=77 // pred_region
              // Predicated region
              $region94: #{decoder_up_block.6} parent=81 // pred_check
                _
              $region95: #{decoder_up_block.6} parent=81 // pred_check_branch
                %386 = sbr.rel (0) target = $region97
              $region96: #{decoder_up_block.6} parent=81 // pred_region
                loop: start=0, step=1, limit=1
                $region98: #{decoder_up_block.6} parent=96 // loop_pre_header
                  _
                $region99: #{decoder_up_block.6} parent=96 // loop_header
                  %s388 = sphi 0, %s392
                  %p389 = scmp.ge.s32.totalorder %s388, 1
                  %s393 = sphi %s359, %s359
                  %s394 = sphi %s364, %s364
                $region100: #{decoder_up_block.6} parent=96 // loop_header_branch
                  %391 = sbr.rel (%p389) target = $region104
                $region101: #{decoder_up_block.6} parent=96 // loop_body
                  %v395 = vld [vmem:[%s393] sm:$0xff]
                  %396 = vst [vmem:[%s394] sm:$0xff] %v395
                  %v397 = vld [vmem:[%s393 + $0x8] sm:$0xff]
                  %398 = vst [vmem:[%s394 + $0x20] sm:$0xff] %v397
                $region102: #{decoder_up_block.6} parent=96 // loop_footer
                  %s392 = sadd.s32 1, %s388
                $region103: #{decoder_up_block.6} parent=96 // loop_footer_branch
                  %387 = sbr.rel target = $region99
                $region104: #{decoder_up_block.6} parent=96 // loop_exit
                  _
              $region97: #{decoder_up_block.6} parent=81 // pred_fallthru
                _
              // Predicated region
              $region105: #{decoder_up_block.6} parent=81 // pred_check
                _
              $region106: #{decoder_up_block.6} parent=81 // pred_check_branch
                %400 = sbr.rel target = $region108
              $region107: #{decoder_up_block.6} parent=81 // pred_region
                _
              $region108: #{decoder_up_block.6} parent=81 // pred_fallthru
                _
            $region82: #{decoder_up_block.6} parent=77 // pred_fallthru
              _
            // Predicated region
            $region83: #{decoder_up_block.6} parent=77 // pred_check
              _
            $region84: #{decoder_up_block.6} parent=77 // pred_check_branch
              %370 = sbr.rel target = $region86
            $region85: #{decoder_up_block.6} parent=77 // pred_region
              %s372 = ssub.s32 256, 1
              loop: start=0, step=1, limit=1
              $region87: #{decoder_up_block.6} parent=85 // loop_pre_header
                _
              $region88: #{decoder_up_block.6} parent=85 // loop_header
                %s374 = sphi 0, %s378
                %p375 = scmp.ge.s32.totalorder %s374, 1
                %s379 = sphi %s359, %s359
                %s380 = sphi %s364, %s364
              $region89: #{decoder_up_block.6} parent=85 // loop_header_branch
                %377 = sbr.rel (%p375) target = $region93
              $region90: #{decoder_up_block.6} parent=85 // loop_body
                %v381 = vld [vmem:[%s379] sm:%s372]
                %382 = vst [vmem:[%s380] sm:%s372] %v381
                %v383 = vld [vmem:[%s379 + $0x8] sm:%s372]
                %384 = vst [vmem:[%s380 + $0x20] sm:%s372] %v383
              $region91: #{decoder_up_block.6} parent=85 // loop_footer
                %s378 = sadd.s32 1, %s374
              $region92: #{decoder_up_block.6} parent=85 // loop_footer_branch
                %373 = sbr.rel target = $region88
              $region93: #{decoder_up_block.6} parent=85 // loop_exit
                _
            $region86: #{decoder_up_block.6} parent=77 // pred_fallthru
              _
          $region78: #{decoder_up_block.6} parent=73 // pred_fallthru
            _
          %401 = vnop
        $region74: #{decoder_up_block.6} parent=61 // pred_fallthru
          _
        // Predicated region
        $region109: #{decoder_up_block.6} parent=61 // pred_check
          %p402 = pneg %p102
        $region110: #{decoder_up_block.6} parent=61 // pred_check_branch
          %404 = sbr.rel (%p402) target = $region112
        $region111: #{decoder_up_block.6} parent=61 // pred_region
          _
        $region112: #{decoder_up_block.6} parent=61 // pred_fallthru
          _
        // Predicated region
        $region113: #{decoder_up_block.6} parent=61 // pred_check
          %p405 = pneg %p123
        $region114: #{decoder_up_block.6} parent=61 // pred_check_branch
          %407 = sbr.rel (%p405) target = $region116
        $region115: #{decoder_up_block.6} parent=61 // pred_region
          _
        $region116: #{decoder_up_block.6} parent=61 // pred_fallthru
          _
        // Predicated region
        $region117: #{decoder_up_block.6} parent=61 // pred_check
          %p408 = pneg %p102
        $region118: #{decoder_up_block.6} parent=61 // pred_check_branch
          %410 = sbr.rel (%p408) target = $region120
        $region119: #{decoder_up_block.6} parent=61 // pred_region
          _
        $region120: #{decoder_up_block.6} parent=61 // pred_fallthru
          _
        // Predicated region
        $region121: #{decoder_up_block.6} parent=61 // pred_check
          %p411 = pneg %p123
        $region122: #{decoder_up_block.6} parent=61 // pred_check_branch
          %413 = sbr.rel (%p411) target = $region124
        $region123: #{decoder_up_block.6} parent=61 // pred_region
          _
        $region124: #{decoder_up_block.6} parent=61 // pred_fallthru
          _
      $region62: #{decoder_up_block.6} parent=5 // pred_fallthru
        _
      %p414 = scmp.le.s32.totalorder 2, %s11
      // Predicated region
      $region125: #{decoder_up_block.6} parent=5 // pred_check
        %p415 = pneg %p414
      $region126: #{decoder_up_block.6} parent=5 // pred_check_branch
        %417 = sbr.rel (%p415) target = $region128
      $region127: #{decoder_up_block.6} parent=5 // pred_region
        %s418 = ssub.s32 %s11, 2
        // Predicated region
        $region129: #{decoder_up_block.6} parent=127 // pred_check
          %p419 = pneg %p87
        $region130: #{decoder_up_block.6} parent=127 // pred_check_branch
          %421 = sbr.rel (%p419) target = $region132
        $region131: #{decoder_up_block.6} parent=127 // pred_region
          %s422 = sand.u32 %s72, 1
          %s423 = sand.u32 %s72, 1
          %s424 = smul.addr %s423, 16
          %s425 = scalar_lea.vmem [#allocation3], %s424
        $region132: #{decoder_up_block.6} parent=127 // pred_fallthru
          _
      $region128: #{decoder_up_block.6} parent=5 // pred_fallthru
        _
    $region6: #{decoder_up_block.6} parent=1 // loop_footer
      %s15 = sadd.s32 1, %s11
    $region7: #{decoder_up_block.6} parent=1 // loop_footer_branch
      %10 = sbr.rel target = $region3
    $region8: #{decoder_up_block.6} parent=1 // loop_exit
      _

// kernel: decoder_up_block.7
$region0: #{decoder_up_block.7}
  #allocation0 [shape = 'u32[]', space=smem, size = 0x4, offset = 0x4, fixed_abs, tag = 'smem constant byte address 0x4 - core index']
  #allocation1 [shape = 'u32[144,128]{1,0:T(1,128)}', space=vmem, size = 0x12000, scoped, tag = 'internal scratch']
  #allocation2 [shape = 'f32[1,1]{1,0:T(1,128)S(1)}', space=vmem, size = 0x200, scoped, tag = 'scoped memory for decoder_up_block.7']
  %s0 = inlined_call_operand.vmem [shape: f32[16,512], index: 0, kind: input, shape index: {}]
  %s1 = inlined_call_operand.vmem [shape: f32[16,1], index: 1, kind: input, shape index: {}]
  %s2 = inlined_call_operand.vmem [shape: f32[16,1], index: 2, kind: input, shape index: {}]
  %s3 = inlined_call_operand.<no memory space> [shape: f32[1,1], index: 3, kind: input, shape index: {}]
  %s4 = inlined_call_operand.vmem [shape: f32[16,512], index: 4, kind: output, shape index: {}]
  %s5 = sld [smem:[#allocation0]]
  $region121: #{decoder_up_block.7} parent=0
    _
  %s7 = ssub.s32 1, %s5
  %s8 = scalar_select 0, %s7, %s5
  %v9 = vstv %s3
  %10 = vst [vmem:[#allocation2] sm:$0x1] %v9
  $region1: #{decoder_up_block.7} parent=0
    #allocation3 [shape = 'u8[16384]{0}', space=vmem, size = 0x4000, scoped, tag = 'input window, operand 0']
    #allocation4 [shape = 'u8[16384]{0}', space=vmem, size = 0x4000, scoped, tag = 'output window, operand 0']
    loop: start=0, step=1, limit=6
    $region2: #{decoder_up_block.7} parent=1 // loop_pre_header
      _
    $region3: #{decoder_up_block.7} parent=1 // loop_header
      %s12 = sphi 0, %s16
      %p13 = scmp.ge.s32.totalorder %s12, 6
      %s22 = sphi 0, %s24
      %s25 = sphi 0, %s22
      %s26 = sphi 0, %s25
      %s42 = sphi 0, %s26
      %s46 = sphi 0, %s46
      %s48 = sphi 0, %s46
      %s49 = sphi 0, %s48
      %s63 = sphi 0, %s49
      %s67 = sphi 0, %s67
      %s69 = sphi 0, %s67
      %s70 = sphi 0, %s69
      %s84 = sphi 0, %s70
      %s88 = sphi 0, %s88
      %s90 = sphi 0, %s88
      %s91 = sphi 0, %s90
      %s105 = sphi 0, %s91
      %s111 = sphi 0, %s113
      %s114 = sphi 0, %s111
      %s115 = sphi 0, %s114
      %s131 = sphi 0, %s115
    $region4: #{decoder_up_block.7} parent=1 // loop_header_branch
      %15 = sbr.rel (%p13) target = $region8
    $region5: #{decoder_up_block.7} parent=1 // loop_body
      %s17 = ssub.s32 %s12, 1
      %s18 = ssub.s32 %s12, 2
      %s19 = sadd.s32 %s12, 1
      %s20 = ssub.s32 %s12, %s19
      %p21 = scmp.eq.s32.totalorder %s20, 0
      %s23 = sadd.s32 %s22, 1
      %s24 = scalar_select %p21, %s22, %s23
      %p27 = pneg %p21
      %p28 = scmp.eq.s32.totalorder %s12, 3
      %p29 = por %p27, %p28
      %p30 = scmp.ne.s32.totalorder %s22, %s25
      %p31 = scmp.eq.s32.totalorder %s12, 0
      %p32 = por %p30, %p31
      %p33 = scmp.ne.s32.totalorder %s22, %s25
      %p34 = scmp.eq.s32.totalorder %s17, 3
      %p35 = por %p33, %p34
      %p36 = scmp.ne.s32.totalorder %s25, %s26
      %p37 = scmp.eq.s32.totalorder %s17, 0
      %p38 = por %p36, %p37
      %p39 = scmp.ne.s32.totalorder %s25, %s26
      %p40 = scmp.eq.s32.totalorder %s18, 3
      %p41 = por %p39, %p40
      %p43 = scmp.ne.s32.totalorder %s26, %s42
      %p44 = scmp.eq.s32.totalorder %s18, 0
      %p45 = por %p43, %p44
      %s47 = sadd.s32 %s46, 1
      %p50 = scmp.eq.s32.totalorder %s12, 3
      %p51 = scmp.ne.s32.totalorder %s46, %s48
      %p52 = scmp.eq.s32.totalorder %s12, 0
      %p53 = por %p51, %p52
      %p54 = scmp.ne.s32.totalorder %s46, %s48
      %p55 = scmp.eq.s32.totalorder %s17, 3
      %p56 = por %p54, %p55
      %p57 = scmp.ne.s32.totalorder %s48, %s49
      %p58 = scmp.eq.s32.totalorder %s17, 0
      %p59 = por %p57, %p58
      %p60 = scmp.ne.s32.totalorder %s48, %s49
      %p61 = scmp.eq.s32.totalorder %s18, 3
      %p62 = por %p60, %p61
      %p64 = scmp.ne.s32.totalorder %s49, %s63
      %p65 = scmp.eq.s32.totalorder %s18, 0
      %p66 = por %p64, %p65
      %s68 = sadd.s32 %s67, 1
      %p71 = scmp.eq.s32.totalorder %s12, 3
      %p72 = scmp.ne.s32.totalorder %s67, %s69
      %p73 = scmp.eq.s32.totalorder %s12, 0
      %p74 = por %p72, %p73
      %p75 = scmp.ne.s32.totalorder %s67, %s69
      %p76 = scmp.eq.s32.totalorder %s17, 3
      %p77 = por %p75, %p76
      %p78 = scmp.ne.s32.totalorder %s69, %s70
      %p79 = scmp.eq.s32.totalorder %s17, 0
      %p80 = por %p78, %p79
      %p81 = scmp.ne.s32.totalorder %s69, %s70
      %p82 = scmp.eq.s32.totalorder %s18, 3
      %p83 = por %p81, %p82
      %p85 = scmp.ne.s32.totalorder %s70, %s84
      %p86 = scmp.eq.s32.totalorder %s18, 0
      %p87 = por %p85, %p86
      %s89 = sadd.s32 %s88, 1
      %p92 = scmp.eq.s32.totalorder %s12, 3
      %p93 = scmp.ne.s32.totalorder %s88, %s90
      %p94 = scmp.eq.s32.totalorder %s12, 0
      %p95 = por %p93, %p94
      %p96 = scmp.ne.s32.totalorder %s88, %s90
      %p97 = scmp.eq.s32.totalorder %s17, 3
      %p98 = por %p96, %p97
      %p99 = scmp.ne.s32.totalorder %s90, %s91
      %p100 = scmp.eq.s32.totalorder %s17, 0
      %p101 = por %p99, %p100
      %p102 = scmp.ne.s32.totalorder %s90, %s91
      %p103 = scmp.eq.s32.totalorder %s18, 3
      %p104 = por %p102, %p103
      %p106 = scmp.ne.s32.totalorder %s91, %s105
      %p107 = scmp.eq.s32.totalorder %s18, 0
      %p108 = por %p106, %p107
      %s109 = ssub.s32 %s12, %s19
      %p110 = scmp.eq.s32.totalorder %s109, 0
      %s112 = sadd.s32 %s111, 1
      %s113 = scalar_select %p110, %s111, %s112
      %p116 = pneg %p110
      %p117 = scmp.eq.s32.totalorder %s12, 3
      %p118 = por %p116, %p117
      %p119 = scmp.ne.s32.totalorder %s111, %s114
      %p120 = scmp.eq.s32.totalorder %s12, 0
      %p121 = por %p119, %p120
      %p122 = scmp.ne.s32.totalorder %s111, %s114
      %p123 = scmp.eq.s32.totalorder %s17, 3
      %p124 = por %p122, %p123
      %p125 = scmp.ne.s32.totalorder %s114, %s115
      %p126 = scmp.eq.s32.totalorder %s17, 0
      %p127 = por %p125, %p126
      %p128 = scmp.ne.s32.totalorder %s114, %s115
      %p129 = scmp.eq.s32.totalorder %s18, 3
      %p130 = por %p128, %p129
      %p132 = scmp.ne.s32.totalorder %s115, %s131
      %p133 = scmp.eq.s32.totalorder %s18, 0
      %p134 = por %p132, %p133
      %p135 = scmp.le.s32.totalorder 1, %s12
      %p136 = scmp.lt.s32.totalorder %s12, 5
      %p137 = pnand %p135, %p136
      %p138 = pneg %p137
      // Predicated region
      $region9: #{decoder_up_block.7} parent=5 // pred_check
        _
      $region10: #{decoder_up_block.7} parent=5 // pred_check_branch
        %140 = sbr.rel (%p137) target = $region12
      $region11: #{decoder_up_block.7} parent=5 // pred_region
        %s141 = ssub.s32 %s12, 1
        // Predicated region
        $region13: #{decoder_up_block.7} parent=11 // pred_check
          %p142 = pneg %p59
        $region14: #{decoder_up_block.7} parent=11 // pred_check_branch
          %144 = sbr.rel (%p142) target = $region16
        $region15: #{decoder_up_block.7} parent=11 // pred_region
          _
        $region16: #{decoder_up_block.7} parent=11 // pred_fallthru
          _
        // Predicated region
        $region17: #{decoder_up_block.7} parent=11 // pred_check
          %p145 = pneg %p80
        $region18: #{decoder_up_block.7} parent=11 // pred_check_branch
          %147 = sbr.rel (%p145) target = $region20
        $region19: #{decoder_up_block.7} parent=11 // pred_region
          _
        $region20: #{decoder_up_block.7} parent=11 // pred_fallthru
          _
        // Predicated region
        $region21: #{decoder_up_block.7} parent=11 // pred_check
          %p148 = pneg %p101
        $region22: #{decoder_up_block.7} parent=11 // pred_check_branch
          %150 = sbr.rel (%p148) target = $region24
        $region23: #{decoder_up_block.7} parent=11 // pred_region
          _
        $region24: #{decoder_up_block.7} parent=11 // pred_fallthru
          _
      $region12: #{decoder_up_block.7} parent=5 // pred_fallthru
        _
      %p151 = scmp.lt.s32.totalorder %s12, 4
      // Predicated region
      $region25: #{decoder_up_block.7} parent=5 // pred_check
        %p152 = pneg %p151
      $region26: #{decoder_up_block.7} parent=5 // pred_check_branch
        %154 = sbr.rel (%p152) target = $region28
      $region27: #{decoder_up_block.7} parent=5 // pred_region
        // Predicated region
        $region29: #{decoder_up_block.7} parent=27 // pred_check
          %p155 = pneg %p32
        $region30: #{decoder_up_block.7} parent=27 // pred_check_branch
          %157 = sbr.rel (%p155) target = $region32
        $region31: #{decoder_up_block.7} parent=27 // pred_region
          %s158 = sand.u32 %s22, 1
          %s159 = sand.u32 %s22, 1
          %s160 = smul.addr %s159, 16
          %s161 = scalar_lea.vmem [#allocation3], %s160
          %s162 = smul.addr %s12, 8
          %s163 = scalar_lea.vmem %s0, %s162
          // Predicated region
          $region33: #{decoder_up_block.7} parent=31 // pred_check
            _
          $region34: #{decoder_up_block.7} parent=31 // pred_check_branch
            %165 = sbr.rel (0) target = $region36
          $region35: #{decoder_up_block.7} parent=31 // pred_region
            // Predicated region
            $region37: #{decoder_up_block.7} parent=35 // pred_check
              _
            $region38: #{decoder_up_block.7} parent=35 // pred_check_branch
              %167 = sbr.rel (0) target = $region40
            $region39: #{decoder_up_block.7} parent=35 // pred_region
              // Predicated region
              $region52: #{decoder_up_block.7} parent=39 // pred_check
                _
              $region53: #{decoder_up_block.7} parent=39 // pred_check_branch
                %185 = sbr.rel (0) target = $region55
              $region54: #{decoder_up_block.7} parent=39 // pred_region
                loop: start=0, step=1, limit=1
                $region56: #{decoder_up_block.7} parent=54 // loop_pre_header
                  _
                $region57: #{decoder_up_block.7} parent=54 // loop_header
                  %s187 = sphi 0, %s191
                  %p188 = scmp.ge.s32.totalorder %s187, 1
                  %s192 = sphi %s163, %s163
                  %s193 = sphi %s161, %s161
                $region58: #{decoder_up_block.7} parent=54 // loop_header_branch
                  %190 = sbr.rel (%p188) target = $region62
                $region59: #{decoder_up_block.7} parent=54 // loop_body
                  %v194 = vld [vmem:[%s192] sm:$0xff]
                  %195 = vst [vmem:[%s193] sm:$0xff] %v194
                  %v196 = vld [vmem:[%s192 + $0x20] sm:$0xff]
                  %197 = vst [vmem:[%s193 + $0x8] sm:$0xff] %v196
                $region60: #{decoder_up_block.7} parent=54 // loop_footer
                  %s191 = sadd.s32 1, %s187
                $region61: #{decoder_up_block.7} parent=54 // loop_footer_branch
                  %186 = sbr.rel target = $region57
                $region62: #{decoder_up_block.7} parent=54 // loop_exit
                  _
              $region55: #{decoder_up_block.7} parent=39 // pred_fallthru
                _
              // Predicated region
              $region63: #{decoder_up_block.7} parent=39 // pred_check
                _
              $region64: #{decoder_up_block.7} parent=39 // pred_check_branch
                %199 = sbr.rel target = $region66
              $region65: #{decoder_up_block.7} parent=39 // pred_region
                _
              $region66: #{decoder_up_block.7} parent=39 // pred_fallthru
                _
            $region40: #{decoder_up_block.7} parent=35 // pred_fallthru
              _
            // Predicated region
            $region41: #{decoder_up_block.7} parent=35 // pred_check
              _
            $region42: #{decoder_up_block.7} parent=35 // pred_check_branch
              %169 = sbr.rel target = $region44
            $region43: #{decoder_up_block.7} parent=35 // pred_region
              %s171 = ssub.s32 256, 1
              loop: start=0, step=1, limit=1
              $region45: #{decoder_up_block.7} parent=43 // loop_pre_header
                _
              $region46: #{decoder_up_block.7} parent=43 // loop_header
                %s173 = sphi 0, %s177
                %p174 = scmp.ge.s32.totalorder %s173, 1
                %s178 = sphi %s163, %s163
                %s179 = sphi %s161, %s161
              $region47: #{decoder_up_block.7} parent=43 // loop_header_branch
                %176 = sbr.rel (%p174) target = $region51
              $region48: #{decoder_up_block.7} parent=43 // loop_body
                %v180 = vld [vmem:[%s178] sm:%s171]
                %181 = vst [vmem:[%s179] sm:%s171] %v180
                %v182 = vld [vmem:[%s178 + $0x20] sm:%s171]
                %183 = vst [vmem:[%s179 + $0x8] sm:%s171] %v182
              $region49: #{decoder_up_block.7} parent=43 // loop_footer
                %s177 = sadd.s32 1, %s173
              $region50: #{decoder_up_block.7} parent=43 // loop_footer_branch
                %172 = sbr.rel target = $region46
              $region51: #{decoder_up_block.7} parent=43 // loop_exit
                _
            $region44: #{decoder_up_block.7} parent=35 // pred_fallthru
              _
          $region36: #{decoder_up_block.7} parent=31 // pred_fallthru
            _
          %200 = vnop
        $region32: #{decoder_up_block.7} parent=27 // pred_fallthru
          _
      $region28: #{decoder_up_block.7} parent=5 // pred_fallthru
        _
      %p201 = scmp.le.s32.totalorder 1, %s12
      %p202 = scmp.lt.s32.totalorder %s12, 5
      %p203 = pnand %p201, %p202
      %p204 = pneg %p203
      // Predicated region
      $region67: #{decoder_up_block.7} parent=5 // pred_check
        _
      $region68: #{decoder_up_block.7} parent=5 // pred_check_branch
        %206 = sbr.rel (%p203) target = $region70
      $region69: #{decoder_up_block.7} parent=5 // pred_region
        %s207 = ssub.s32 %s12, 1
        %s208 = sand.u32 %s25, 1
        %s209 = sand.u32 %s25, 1
        %s210 = smul.addr %s209, 16
        %s211 = scalar_lea.vmem [#allocation3], %s210
        // Predicated region
        $region71: #{decoder_up_block.7} parent=69 // pred_check
          %p212 = pneg %p38
        $region72: #{decoder_up_block.7} parent=69 // pred_check_branch
          %214 = sbr.rel (%p212) target = $region74
        $region73: #{decoder_up_block.7} parent=69 // pred_region
          _
        $region74: #{decoder_up_block.7} parent=69 // pred_fallthru
          _
        %s215 = sand.u32 %s25, 1
        %s216 = sand.u32 %s25, 1
        %s217 = smul.addr %s216, 16
        %s218 = scalar_lea.vmem [#allocation3], %s217
        %p219 = pneg %p38
        %p220 = pneg %p35
        %p221 = pneg %p59
        %p222 = pneg %p56
        %p223 = pneg %p80
        %p224 = pneg %p77
        %p225 = pneg %p101
        %p226 = pneg %p98
        %p227 = pneg %p127
        %p228 = pneg %p124
        %s229 = sand.u32 %s114, 1
        %s230 = sand.u32 %s114, 1
        %s231 = smul.addr %s230, 16
        %s232 = scalar_lea.vmem [#allocation4], %s231
        %v233 = vld [vmem:[%s211] sm:$0xff]
        %v234 = vld [vmem:[%s211 + $0x8] sm:$0xff]
        %v235 = vld [vmem:[%s1] sm:$0xff]
        %v236 = vld [vmem:[%s1 + $0x8] sm:$0xff]
        %238 = vset.pattern.permute.xlu0 0
        %239 = vperm.xlu0 %238, %v235
        %v240 = vpop.permute.xlu0 %239
        %243 = vset.pattern.permute.xlu0 0
        %244 = vperm.xlu0 %243, %v236
        %v245 = vpop.permute.xlu0 %244
        %v247 = vmul.f32 %v233, %v240
        %v248 = vmul.f32 %v234, %v245
        %v249 = vld [vmem:[%s2] sm:$0xff]
        %v250 = vld [vmem:[%s2 + $0x8] sm:$0xff]
        %252 = vset.pattern.permute.xlu0 0
        %253 = vperm.xlu0 %252, %v249
        %v254 = vpop.permute.xlu0 %253
        %257 = vset.pattern.permute.xlu0 0
        %258 = vperm.xlu0 %257, %v250
        %v259 = vpop.permute.xlu0 %258
        %v261 = vadd.f32 %v247, %v254
        %v262 = vadd.f32 %v248, %v259
        %vm263 = vcmp.ge.f32.partialorder %v261, 0.0
        %vm264 = vcmp.ge.f32.partialorder %v262, 0.0
        %v265 = vld [vmem:[#allocation2] sm:$0x1]
        %v267 = vlaneseq
        %v268 = vshrl.u32 %v267, 7
        %v269 = vsub.s32 0, %v268
        %v270 = vrot.slane %v265, %v269
        %271 = vset.pattern.permute.xlu0 0
        %272 = vperm.xlu0 %271, %v270
        %v273 = vpop.permute.xlu0 %272
        %v275 = vmul.f32 %v273, %v261
        %v276 = vmul.f32 %v273, %v262
        %v277 = vsel %vm263, %v261, %v275
        %v278 = vsel %vm264, %v262, %v276
        %279 = vst [vmem:[%s232] sm:$0xff] %v277
        %280 = vst [vmem:[%s232 + $0x8] sm:$0xff] %v278
        %s281 = sand.u32 %s114, 1
        %s282 = sand.u32 %s114, 1
        %s283 = smul.addr %s282, 16
        %s284 = scalar_lea.vmem [#allocation4], %s283
        // Predicated region
        $region75: #{decoder_up_block.7} parent=69 // pred_check
          %p285 = pneg %p124
        $region76: #{decoder_up_block.7} parent=69 // pred_check_branch
          %287 = sbr.rel (%p285) target = $region78
        $region77: #{decoder_up_block.7} parent=69 // pred_region
          %s288 = smul.addr %s17, 8
          %s289 = scalar_lea.vmem %s4, %s288
          // Predicated region
          $region79: #{decoder_up_block.7} parent=77 // pred_check
            _
          $region80: #{decoder_up_block.7} parent=77 // pred_check_branch
            %291 = sbr.rel (0) target = $region82
          $region81: #{decoder_up_block.7} parent=77 // pred_region
            // Predicated region
            $region83: #{decoder_up_block.7} parent=81 // pred_check
              _
            $region84: #{decoder_up_block.7} parent=81 // pred_check_branch
              %293 = sbr.rel (0) target = $region86
            $region85: #{decoder_up_block.7} parent=81 // pred_region
              // Predicated region
              $region98: #{decoder_up_block.7} parent=85 // pred_check
                _
              $region99: #{decoder_up_block.7} parent=85 // pred_check_branch
                %311 = sbr.rel (0) target = $region101
              $region100: #{decoder_up_block.7} parent=85 // pred_region
                loop: start=0, step=1, limit=1
                $region102: #{decoder_up_block.7} parent=100 // loop_pre_header
                  _
                $region103: #{decoder_up_block.7} parent=100 // loop_header
                  %s313 = sphi 0, %s317
                  %p314 = scmp.ge.s32.totalorder %s313, 1
                  %s318 = sphi %s284, %s284
                  %s319 = sphi %s289, %s289
                $region104: #{decoder_up_block.7} parent=100 // loop_header_branch
                  %316 = sbr.rel (%p314) target = $region108
                $region105: #{decoder_up_block.7} parent=100 // loop_body
                  %v320 = vld [vmem:[%s318] sm:$0xff]
                  %321 = vst [vmem:[%s319] sm:$0xff] %v320
                  %v322 = vld [vmem:[%s318 + $0x8] sm:$0xff]
                  %323 = vst [vmem:[%s319 + $0x20] sm:$0xff] %v322
                $region106: #{decoder_up_block.7} parent=100 // loop_footer
                  %s317 = sadd.s32 1, %s313
                $region107: #{decoder_up_block.7} parent=100 // loop_footer_branch
                  %312 = sbr.rel target = $region103
                $region108: #{decoder_up_block.7} parent=100 // loop_exit
                  _
              $region101: #{decoder_up_block.7} parent=85 // pred_fallthru
                _
              // Predicated region
              $region109: #{decoder_up_block.7} parent=85 // pred_check
                _
              $region110: #{decoder_up_block.7} parent=85 // pred_check_branch
                %325 = sbr.rel target = $region112
              $region111: #{decoder_up_block.7} parent=85 // pred_region
                _
              $region112: #{decoder_up_block.7} parent=85 // pred_fallthru
                _
            $region86: #{decoder_up_block.7} parent=81 // pred_fallthru
              _
            // Predicated region
            $region87: #{decoder_up_block.7} parent=81 // pred_check
              _
            $region88: #{decoder_up_block.7} parent=81 // pred_check_branch
              %295 = sbr.rel target = $region90
            $region89: #{decoder_up_block.7} parent=81 // pred_region
              %s297 = ssub.s32 256, 1
              loop: start=0, step=1, limit=1
              $region91: #{decoder_up_block.7} parent=89 // loop_pre_header
                _
              $region92: #{decoder_up_block.7} parent=89 // loop_header
                %s299 = sphi 0, %s303
                %p300 = scmp.ge.s32.totalorder %s299, 1
                %s304 = sphi %s284, %s284
                %s305 = sphi %s289, %s289
              $region93: #{decoder_up_block.7} parent=89 // loop_header_branch
                %302 = sbr.rel (%p300) target = $region97
              $region94: #{decoder_up_block.7} parent=89 // loop_body
                %v306 = vld [vmem:[%s304] sm:%s297]
                %307 = vst [vmem:[%s305] sm:%s297] %v306
                %v308 = vld [vmem:[%s304 + $0x8] sm:%s297]
                %309 = vst [vmem:[%s305 + $0x20] sm:%s297] %v308
              $region95: #{decoder_up_block.7} parent=89 // loop_footer
                %s303 = sadd.s32 1, %s299
              $region96: #{decoder_up_block.7} parent=89 // loop_footer_branch
                %298 = sbr.rel target = $region92
              $region97: #{decoder_up_block.7} parent=89 // loop_exit
                _
            $region90: #{decoder_up_block.7} parent=81 // pred_fallthru
              _
          $region82: #{decoder_up_block.7} parent=77 // pred_fallthru
            _
          %326 = vnop
        $region78: #{decoder_up_block.7} parent=69 // pred_fallthru
          _
      $region70: #{decoder_up_block.7} parent=5 // pred_fallthru
        _
      %p327 = scmp.le.s32.totalorder 2, %s12
      // Predicated region
      $region113: #{decoder_up_block.7} parent=5 // pred_check
        %p328 = pneg %p327
      $region114: #{decoder_up_block.7} parent=5 // pred_check_branch
        %330 = sbr.rel (%p328) target = $region116
      $region115: #{decoder_up_block.7} parent=5 // pred_region
        %s331 = ssub.s32 %s12, 2
        // Predicated region
        $region117: #{decoder_up_block.7} parent=115 // pred_check
          %p332 = pneg %p130
        $region118: #{decoder_up_block.7} parent=115 // pred_check_branch
          %334 = sbr.rel (%p332) target = $region120
        $region119: #{decoder_up_block.7} parent=115 // pred_region
          %s335 = sand.u32 %s115, 1
          %s336 = sand.u32 %s115, 1
          %s337 = smul.addr %s336, 16
          %s338 = scalar_lea.vmem [#allocation4], %s337
        $region120: #{decoder_up_block.7} parent=115 // pred_fallthru
          _
      $region116: #{decoder_up_block.7} parent=5 // pred_fallthru
        _
    $region6: #{decoder_up_block.7} parent=1 // loop_footer
      %s16 = sadd.s32 1, %s12
    $region7: #{decoder_up_block.7} parent=1 // loop_footer_branch
      %11 = sbr.rel target = $region3
    $region8: #{decoder_up_block.7} parent=1 // loop_exit
      _

</llo_original>
